<compile_context>
chip_gen: v5e
topology: v5e:2x2
jax: 0.10.0
libtpu: 0.0.40
codegen_flags: <defaults>
</compile_context>

<pallas_src>
import math
from functools import partial

import jax
import jax.numpy as jnp
from jax import lax
from jax.experimental import pallas as pl
from jax.experimental.pallas import tpu as pltpu

_VMEM_LIMIT_CACHE = None


def _vmem_limit():
    """Generation-aware scoped-VMEM limit (3/4 of physical, capped at 100 MiB)."""
    global _VMEM_LIMIT_CACHE
    if _VMEM_LIMIT_CACHE is None:
        try:
            cap = pltpu.get_tpu_info().vmem_capacity_bytes
            _VMEM_LIMIT_CACHE = int(min(cap * 3 // 4, 100 * 1024 * 1024))
        except Exception:
            _VMEM_LIMIT_CACHE = 64 * 1024 * 1024
    return _VMEM_LIMIT_CACHE


def _tile(dim, block):
    """Clamp a requested block size to the dim and require exact tiling."""
    t = min(dim, block)
    assert dim % t == 0, f"block {t} must divide dim {dim}"
    return t


# ----------------------------------------------------------------------------
# Fused Q/K/V projection kernel (tiled matmul + bias, K-axis f32 accumulation)
# ----------------------------------------------------------------------------
def _make_qkv_kernel(n_x, scale):
    """n_x == 1: shared activation (self-attention); n_x == 3: distinct q/k/v."""

    def kernel(*refs):
        x_refs = refs[:n_x]
        wq_ref, wk_ref, wv_ref = refs[n_x:n_x + 3]
        bq_ref, bk_ref, bv_ref = refs[n_x + 3:n_x + 6]
        q_ref, k_ref, v_ref = refs[n_x + 6:n_x + 9]
        qacc, kacc, vacc = refs[n_x + 9:n_x + 12]

        kk = pl.program_id(2)

        @pl.when(kk == 0)
        def _():
            qacc[...] = jnp.zeros_like(qacc)
            kacc[...] = jnp.zeros_like(kacc)
            vacc[...] = jnp.zeros_like(vacc)

        # bf16 operands on the MXU; accumulate in float32.
        xq = x_refs[0][...]
        xk = x_refs[1][...] if n_x == 3 else xq
        xv = x_refs[2][...] if n_x == 3 else xq
        qacc[...] += jnp.dot(xq, wq_ref[...], preferred_element_type=jnp.float32)
        kacc[...] += jnp.dot(xk, wk_ref[...], preferred_element_type=jnp.float32)
        vacc[...] += jnp.dot(xv, wv_ref[...], preferred_element_type=jnp.float32)

        @pl.when(kk == pl.num_programs(2) - 1)
        def _():
            # Fold the attention scale 1/sqrt(d_k) into q (cheaper than
            # scaling the (Sq,Sk) scores later).
            q_ref[...] = ((qacc[...] + bq_ref[...]) * scale).astype(q_ref.dtype)
            k_ref[...] = (kacc[...] + bk_ref[...]).astype(k_ref.dtype)
            v_ref[...] = (vacc[...] + bv_ref[...]).astype(v_ref.dtype)

    return kernel


def fused_qkv_projection(xs, weights, biases, scale, *,
                         block_m=512, block_n=512, block_k=512):
    """xs: tuple of 1 (shared) or 3 activations, each (N, Din), compute dtype.
    Returns (q, k, v), each (N, Dout), with the attention scale folded into q."""
    n_x = len(xs)
    N, Din = xs[0].shape
    Dout = weights[0].shape[1]
    bm, bn, bk = _tile(N, block_m), _tile(Dout, block_n), _tile(Din, block_k)
    grid = (N // bm, Dout // bn, Din // bk)

    x_spec = pl.BlockSpec((bm, bk), lambda i, j, k: (i, k))
    w_spec = pl.BlockSpec((bk, bn), lambda i, j, k: (k, j))
    b_spec = pl.BlockSpec((1, bn), lambda i, j, k: (0, j))
    o_spec = pl.BlockSpec((bm, bn), lambda i, j, k: (i, j))
    out_sds = jax.ShapeDtypeStruct((N, Dout), xs[0].dtype)

    el = xs[0].dtype.itemsize
    cost = pl.CostEstimate(
        flops=3 * 2 * N * Din * Dout,
        transcendentals=0,
        bytes_accessed=int(el * (n_x * N * Din + 3 * Din * Dout + 3 * N * Dout)
                           + 4 * 3 * Dout))

    return pl.pallas_call(
        _make_qkv_kernel(n_x, scale),
        out_shape=(out_sds, out_sds, out_sds),
        grid=grid,
        in_specs=[x_spec] * n_x + [w_spec] * 3 + [b_spec] * 3,
        out_specs=(o_spec, o_spec, o_spec),
        scratch_shapes=[pltpu.VMEM((bm, bn), jnp.float32)] * 3,
        compiler_params=pltpu.CompilerParams(
            dimension_semantics=("parallel", "parallel", "arbitrary"),
            vmem_limit_bytes=_vmem_limit()),
        cost_estimate=cost,
    )(*xs, *weights, *(b.reshape(1, Dout) for b in biases))


# ----------------------------------------------------------------------------
# Generic tiled linear (output projection): bf16 operands, f32 accumulator
# ----------------------------------------------------------------------------
def _linear_kernel(x_ref, w_ref, b_ref, o_ref, acc_ref):
    kk = pl.program_id(2)

    @pl.when(kk == 0)
    def _():
        acc_ref[...] = jnp.zeros_like(acc_ref)

    acc_ref[...] += jnp.dot(x_ref[...], w_ref[...],
                            preferred_element_type=jnp.float32)

    @pl.when(kk == pl.num_programs(2) - 1)
    def _():
        o_ref[...] = (acc_ref[...] + b_ref[...]).astype(o_ref.dtype)


def pallas_linear(x2d, w, b, *, out_dtype=None,
                  block_m=512, block_n=512, block_k=512):
    """x2d: (N, Din), w: (Din, Dout), b: (Dout,) -> (N, Dout)."""
    N, Din = x2d.shape
    Dout = w.shape[1]
    out_dtype = out_dtype or x2d.dtype
    bm, bn, bk = _tile(N, block_m), _tile(Dout, block_n), _tile(Din, block_k)
    grid = (N // bm, Dout // bn, Din // bk)

    cost = pl.CostEstimate(
        flops=2 * N * Din * Dout,
        transcendentals=0,
        bytes_accessed=int(x2d.dtype.itemsize * (N * Din + Din * Dout)
                           + 4 * (N * Dout + Dout)))

    return pl.pallas_call(
        _linear_kernel,
        out_shape=jax.ShapeDtypeStruct((N, Dout), out_dtype),
        grid=grid,
        in_specs=[pl.BlockSpec((bm, bk), lambda i, j, k: (i, k)),
                  pl.BlockSpec((bk, bn), lambda i, j, k: (k, j)),
                  pl.BlockSpec((1, bn), lambda i, j, k: (0, j))],
        out_specs=pl.BlockSpec((bm, bn), lambda i, j, k: (i, j)),
        scratch_shapes=[pltpu.VMEM((bm, bn), jnp.float32)],
        compiler_params=pltpu.CompilerParams(
            dimension_semantics=("parallel", "parallel", "arbitrary"),
            vmem_limit_bytes=_vmem_limit()),
        cost_estimate=cost,
    )(x2d, w, b.reshape(1, Dout))


# ----------------------------------------------------------------------------
# Flash-style attention on the (seq, batch*d_model) view of the projections
# ----------------------------------------------------------------------------
def _flash_attn_kernel(q_ref, k_ref, v_ref, o_ref, m_sc, l_sc, acc_sc, *,
                       batch_per_block, heads, d_model, d_k):
    kv = pl.program_id(2)

    @pl.when(kv == 0)
    def _():
        m_sc[...] = jnp.full_like(m_sc, -jnp.inf)
        l_sc[...] = jnp.zeros_like(l_sc)
        acc_sc[...] = jnp.zeros_like(acc_sc)

    q = q_ref[...]      # (tq,  batch_per_block * d_model), scale pre-folded
    k = k_ref[...]      # (tkv, batch_per_block * d_model)
    v = v_ref[...]

    # Static (unrolled) loop over the (batch, head) column groups packed along
    # lanes; each does a K=d_k MXU matmul and an online-softmax update.
    for bb in range(batch_per_block):
        for h in range(heads):
            g = bb * heads + h
            c0 = bb * d_model + h * d_k
            q_h = q[:, c0:c0 + d_k]
            k_h = k[:, c0:c0 + d_k]
            v_h = v[:, c0:c0 + d_k]

            # Softmax is over the key axis, matching nn.Softmax(dim=1) on the
            # 'ijbh' scores.  Contract last dims -> no explicit k transpose.
            s = lax.dot_general(q_h, k_h, (((1,), (1,)), ((), ())),
                                preferred_element_type=jnp.float32)  # (tq,tkv)

            m_prev = m_sc[g]
            m_new = jnp.maximum(m_prev, s.max(axis=-1, keepdims=True))
            alpha = jnp.exp(m_prev - m_new)
            p = jnp.exp(s - m_new)
            l_sc[g] = alpha * l_sc[g] + p.sum(axis=-1, keepdims=True)
            acc_sc[g] = alpha * acc_sc[g] + jnp.dot(
                p.astype(v_h.dtype), v_h, preferred_element_type=jnp.float32)
            m_sc[g] = m_new

    @pl.when(kv == pl.num_programs(2) - 1)
    def _():
        for bb in range(batch_per_block):
            for h in range(heads):
                g = bb * heads + h
                c0 = bb * d_model + h * d_k
                inv_l = pl.reciprocal(l_sc[g], approx=True)   # EUP slot
                o_ref[:, c0:c0 + d_k] = (acc_sc[g] * inv_l).astype(o_ref.dtype)
        # TODO(synk): attention-weight dropout skipped (eval-mode identity);
        # mask=None path only.


def pallas_flash_attention(q, k, v, *, batch, heads,
                           batch_per_block=1, block_q=256, block_kv=256):
    """q/k/v: (S, batch*d_model) row-major views of the (S*batch, d_model)
    projection outputs.  Returns the attention output in the same layout."""
    S, BD = q.shape
    d_model = BD // batch
    d_k = d_model // heads
    cb = _tile(batch, batch_per_block)
    tq, tkv = _tile(S, block_q), _tile(S, block_kv)
    grid = (batch // cb, S // tq, S // tkv)
    cols = cb * d_model    # >= 128 lanes -> dense, unmasked stores

    kernel = partial(_flash_attn_kernel, batch_per_block=cb, heads=heads,
                     d_model=d_model, d_k=d_k)

    cost = pl.CostEstimate(
        flops=4 * batch * heads * S * S * d_k,
        transcendentals=batch * heads * S * S,
        bytes_accessed=int(q.dtype.itemsize * 4 * S * BD))

    # TODO(synk): if profiling shows exposed k/v DMA after the bf16 switch,
    # add pipeline_mode=pl.Buffered(3) on the k/v in_specs.
    return pl.pallas_call(
        kernel,
        out_shape=jax.ShapeDtypeStruct((S, BD), q.dtype),
        grid=grid,
        in_specs=[pl.BlockSpec((tq, cols), lambda b, i, j: (i, b)),
                  pl.BlockSpec((tkv, cols), lambda b, i, j: (j, b)),
                  pl.BlockSpec((tkv, cols), lambda b, i, j: (j, b))],
        out_specs=pl.BlockSpec((tq, cols), lambda b, i, j: (i, b)),
        scratch_shapes=[pltpu.VMEM((cb * heads, tq, 1), jnp.float32),
                        pltpu.VMEM((cb * heads, tq, 1), jnp.float32),
                        pltpu.VMEM((cb * heads, tq, d_k), jnp.float32)],
        compiler_params=pltpu.CompilerParams(
            dimension_semantics=("parallel", "parallel", "arbitrary"),
            vmem_limit_bytes=_vmem_limit()),
        cost_estimate=cost,
    )(q, k, v)


# ----------------------------------------------------------------------------
# MultiHeadAttention forward (mask=None path, eval mode)
# ----------------------------------------------------------------------------
def multi_head_attention(query, key, value, params, heads, *,
                         compute_dtype=jnp.bfloat16,
                         proj_blocks=(512, 512, 512),
                         attn_blocks=(1, 256, 256)):
    """query/key/value: (seq_len, batch, d_model) -> (seq_len, batch, d_model)."""
    S, B, D = query.shape
    Dk = D // heads
    N = S * B
    scale = 1.0 / math.sqrt(Dk)
    cd = jnp.dtype(compute_dtype)

    weights = tuple(params[n].astype(cd) for n in ("wq", "wk", "wv"))
    biases = tuple(params[n] for n in ("bq", "bk", "bv"))

    # Self-attention: dedupe the activation DMA (one x tile feeds all 3 dots).
    if (key is query) and (value is query):
        xs = (query.reshape(N, D).astype(cd),)
    else:
        xs = (query.reshape(N, D).astype(cd),
              key.reshape(N, D).astype(cd),
              value.reshape(N, D).astype(cd))

    bm, bn, bk = proj_blocks
    q2, k2, v2 = fused_qkv_projection(xs, weights, biases, scale,
                                      block_m=bm, block_n=bn, block_k=bk)

    # (S*B, D) -> (S, B*D) is a pure row-major reinterpretation (no transpose);
    # the attention kernel slices the per-(batch, head) columns itself.
    cb, tq, tkv = attn_blocks
    x = pallas_flash_attention(q2.reshape(S, B * D), k2.reshape(S, B * D),
                               v2.reshape(S, B * D), batch=B, heads=heads,
                               batch_per_block=cb, block_q=tq, block_kv=tkv)

    out = pallas_linear(x.reshape(N, D), params["wo"].astype(cd), params["bo"],
                        out_dtype=query.dtype,
                        block_m=bm, block_n=bn, block_k=bk)
    return out.reshape(S, B, D)


# ----------------------------------------------------------------------------
# Pure-JAX f32 reference (mirrors the PyTorch forward, eval mode, no mask)
# ----------------------------------------------------------------------------
def reference_mha(query, key, value, params, heads):
    S, B, D = query.shape
    Dk = D // heads
    scale = 1.0 / math.sqrt(Dk)

    def prep(x, w, b):
        return (x @ w + b).reshape(S, B, heads, Dk)

    q = prep(query, params["wq"], params["bq"])
    k = prep(key, params["wk"], params["bk"])
    v = prep(value, params["wv"], params["bv"])
    scores = jnp.einsum("ibhd,jbhd->ijbh", q, k) * scale
    attn = jax.nn.softmax(scores, axis=1)
    x = jnp.einsum("ijbh,jbhd->ibhd", attn, v).reshape(S, B, D)
    return x @ params["wo"] + params["bo"]


# ----------------------------------------------------------------------------
# Main
# ----------------------------------------------------------------------------
if __name__ == "__main__":
    seq_len, batch, d_model, heads = 32, 2, 256, 4   # d_k = 64

    key0 = jax.random.PRNGKey(0)
    ks = jax.random.split(key0, 11)

    def init_w(k, din, dout):
        bound = 1.0 / math.sqrt(din)
        return jax.random.uniform(k, (din, dout), jnp.float32, -bound, bound)

    def init_b(k, din, dout):
        bound = 1.0 / math.sqrt(din)
        return jax.random.uniform(k, (dout,), jnp.float32, -bound, bound)

    params = {
        "wq": init_w(ks[0], d_model, d_model), "bq": init_b(ks[1], d_model, d_model),
        "wk": init_w(ks[2], d_model, d_model), "bk": init_b(ks[3], d_model, d_model),
        "wv": init_w(ks[4], d_model, d_model), "bv": init_b(ks[5], d_model, d_model),
        "wo": init_w(ks[6], d_model, d_model), "bo": init_b(ks[7], d_model, d_model),
    }

    query = jax.random.normal(ks[8], (seq_len, batch, d_model), jnp.float32)
    key_t = jax.random.normal(ks[9], (seq_len, batch, d_model), jnp.float32)
    value = jax.random.normal(ks[10], (seq_len, batch, d_model), jnp.float32)

    # Small blocks so the M/N/K and Q/KV grid axes take multiple steps at toy
    # shapes (exercises the accumulator and online-softmax paths); they respect
    # the bf16 (16, 128) minimum tile.  At real shapes the larger defaults apply.
    mha = partial(multi_head_attention, params=params, heads=heads,
                  proj_blocks=(16, 128, 128), attn_blocks=(1, 16, 16))

    # Cross-attention path (3 distinct activations).
    out = jax.block_until_ready(mha(query, key_t, value))
    ref = reference_mha(query, key_t, value, params, heads)
    assert out.shape == (seq_len, batch, d_model)
    # bf16 operands + flash accumulation + approx reciprocal => loose tolerance
    # vs. the exact f32 reference (still far below any "wrong math" error).
    assert jnp.allclose(out, ref, atol=8e-2, rtol=5e-2), (
        "cross-attn mismatch vs reference: max abs err "
        f"{float(jnp.max(jnp.abs(out - ref)))}")

    # Self-attention path (shared-activation projection kernel).
    out_sa = jax.block_until_ready(mha(query, query, query))
    ref_sa = reference_mha(query, query, query, params, heads)
    assert jnp.allclose(out_sa, ref_sa, atol=8e-2, rtol=5e-2), (
        "self-attn mismatch vs reference: max abs err "
        f"{float(jnp.max(jnp.abs(out_sa - ref_sa)))}")

    print("KERNEL_OK")
</pallas_src>

<mosaic_0001>
module attributes {stable_mosaic.version = 11 : i64} {
  func.func @kernel(%arg0: i32, %arg1: i32, %arg2: i32, %arg3: memref<16x128xbf16, #tpu.memory_space<vmem>>, %arg4: memref<16x128xbf16, #tpu.memory_space<vmem>>, %arg5: memref<16x128xbf16, #tpu.memory_space<vmem>>, %arg6: memref<128x128xbf16, #tpu.memory_space<vmem>>, %arg7: memref<128x128xbf16, #tpu.memory_space<vmem>>, %arg8: memref<128x128xbf16, #tpu.memory_space<vmem>>, %arg9: memref<1x128xf32, #tpu.memory_space<vmem>>, %arg10: memref<1x128xf32, #tpu.memory_space<vmem>>, %arg11: memref<1x128xf32, #tpu.memory_space<vmem>>, %arg12: memref<16x128xbf16, #tpu.memory_space<vmem>>, %arg13: memref<16x128xbf16, #tpu.memory_space<vmem>>, %arg14: memref<16x128xbf16, #tpu.memory_space<vmem>>, %arg15: memref<16x128xf32, #tpu.memory_space<vmem>>, %arg16: memref<16x128xf32, #tpu.memory_space<vmem>>, %arg17: memref<16x128xf32, #tpu.memory_space<vmem>>) attributes {dimension_semantics = [#tpu.dimension_semantics<parallel>, #tpu.dimension_semantics<parallel>, #tpu.dimension_semantics<arbitrary>], iteration_bounds = array<i64: 4, 2, 2>, scalar_prefetch = 0 : i64, scratch_operands = 3 : i64, tpu.core_type = #tpu.core_type<tc>, window_params = [{transform_indices = @transform_0, window_bounds = array<i64: 16, 128>}, {transform_indices = @transform_1, window_bounds = array<i64: 16, 128>}, {transform_indices = @transform_2, window_bounds = array<i64: 16, 128>}, {transform_indices = @transform_3, window_bounds = array<i64: 128, 128>}, {transform_indices = @transform_4, window_bounds = array<i64: 128, 128>}, {transform_indices = @transform_5, window_bounds = array<i64: 128, 128>}, {transform_indices = @transform_6, window_bounds = array<i64: 1, 128>}, {transform_indices = @transform_7, window_bounds = array<i64: 1, 128>}, {transform_indices = @transform_8, window_bounds = array<i64: 1, 128>}, {transform_indices = @transform_9, window_bounds = array<i64: 16, 128>}, {transform_indices = @transform_10, window_bounds = array<i64: 16, 128>}, {transform_indices = @transform_11, window_bounds = array<i64: 16, 128>}]} {
    %c0_i32 = arith.constant 0 : i32
    %0 = arith.cmpi eq, %arg2, %c0_i32 : i32
    %1 = arith.extui %0 : i1 to i32
    %c0_i32_0 = arith.constant 0 : i32
    %2 = arith.cmpi ne, %1, %c0_i32_0 : i32
    scf.if %2 {
      %cst_27 = arith.constant 0.000000e+00 : f32
      %24 = vector.broadcast %cst_27 : f32 to vector<16x128xf32>
      %c0_28 = arith.constant 0 : index
      %c0_29 = arith.constant 0 : index
      %25 = vector.load %arg15[%c0_28, %c0_29] : memref<16x128xf32, #tpu.memory_space<vmem>>, vector<16x128xf32>
      tpu.vector_store %arg15[%c0_28, %c0_29], %24 {strides = array<i32>} : memref<16x128xf32, #tpu.memory_space<vmem>>, vector<16x128xf32>,
      %cst_30 = arith.constant 0.000000e+00 : f32
      %26 = vector.broadcast %cst_30 : f32 to vector<16x128xf32>
      %c0_31 = arith.constant 0 : index
      %c0_32 = arith.constant 0 : index
      %27 = vector.load %arg16[%c0_31, %c0_32] : memref<16x128xf32, #tpu.memory_space<vmem>>, vector<16x128xf32>
      tpu.vector_store %arg16[%c0_31, %c0_32], %26 {strides = array<i32>} : memref<16x128xf32, #tpu.memory_space<vmem>>, vector<16x128xf32>,
      %cst_33 = arith.constant 0.000000e+00 : f32
      %28 = vector.broadcast %cst_33 : f32 to vector<16x128xf32>
      %c0_34 = arith.constant 0 : index
      %c0_35 = arith.constant 0 : index
      %29 = vector.load %arg17[%c0_34, %c0_35] : memref<16x128xf32, #tpu.memory_space<vmem>>, vector<16x128xf32>
      tpu.vector_store %arg17[%c0_34, %c0_35], %28 {strides = array<i32>} : memref<16x128xf32, #tpu.memory_space<vmem>>, vector<16x128xf32>,
    } else {
    }
    %c0 = arith.constant 0 : index
    %c0_1 = arith.constant 0 : index
    %3 = vector.load %arg3[%c0, %c0_1] : memref<16x128xbf16, #tpu.memory_space<vmem>>, vector<16x128xbf16>
    %c0_2 = arith.constant 0 : index
    %c0_3 = arith.constant 0 : index
    %4 = vector.load %arg4[%c0_2, %c0_3] : memref<16x128xbf16, #tpu.memory_space<vmem>>, vector<16x128xbf16>
    %c0_4 = arith.constant 0 : index
    %c0_5 = arith.constant 0 : index
    %5 = vector.load %arg5[%c0_4, %c0_5] : memref<16x128xbf16, #tpu.memory_space<vmem>>, vector<16x128xbf16>
    %c0_6 = arith.constant 0 : index
    %c0_7 = arith.constant 0 : index
    %6 = vector.load %arg15[%c0_6, %c0_7] : memref<16x128xf32, #tpu.memory_space<vmem>>, vector<16x128xf32>
    %c0_8 = arith.constant 0 : index
    %c0_9 = arith.constant 0 : index
    %7 = vector.load %arg6[%c0_8, %c0_9] : memref<128x128xbf16, #tpu.memory_space<vmem>>, vector<128x128xbf16>
    %cst = arith.constant dense<0.000000e+00> : vector<16x128xf32>
    %8 = tpu.matmul %3, %7, %cst {dimension_numbers = #tpu.dot_dimension_numbers<[1], [0], [0], [1], [0, 0, 1, 1], [], []>} : vector<16x128xbf16>, vector<128x128xbf16>, vector<16x128xf32> -> vector<16x128xf32>
    %9 = arith.addf %6, %8 : vector<16x128xf32>
    %c0_10 = arith.constant 0 : index
    %c0_11 = arith.constant 0 : index
    %10 = vector.load %arg15[%c0_10, %c0_11] : memref<16x128xf32, #tpu.memory_space<vmem>>, vector<16x128xf32>
    tpu.vector_store %arg15[%c0_10, %c0_11], %9 {strides = array<i32>} : memref<16x128xf32, #tpu.memory_space<vmem>>, vector<16x128xf32>,
    %c0_12 = arith.constant 0 : index
    %c0_13 = arith.constant 0 : index
    %11 = vector.load %arg16[%c0_12, %c0_13] : memref<16x128xf32, #tpu.memory_space<vmem>>, vector<16x128xf32>
    %c0_14 = arith.constant 0 : index
    %c0_15 = arith.constant 0 : index
    %12 = vector.load %arg7[%c0_14, %c0_15] : memref<128x128xbf16, #tpu.memory_space<vmem>>, vector<128x128xbf16>
    %cst_16 = arith.constant dense<0.000000e+00> : vector<16x128xf32>
    %13 = tpu.matmul %4, %12, %cst_16 {dimension_numbers = #tpu.dot_dimension_numbers<[1], [0], [0], [1], [0, 0, 1, 1], [], []>} : vector<16x128xbf16>, vector<128x128xbf16>, vector<16x128xf32> -> vector<16x128xf32>
    %14 = arith.addf %11, %13 : vector<16x128xf32>
    %c0_17 = arith.constant 0 : index
    %c0_18 = arith.constant 0 : index
    %15 = vector.load %arg16[%c0_17, %c0_18] : memref<16x128xf32, #tpu.memory_space<vmem>>, vector<16x128xf32>
    tpu.vector_store %arg16[%c0_17, %c0_18], %14 {strides = array<i32>} : memref<16x128xf32, #tpu.memory_space<vmem>>, vector<16x128xf32>,
    %c0_19 = arith.constant 0 : index
    %c0_20 = arith.constant 0 : index
    %16 = vector.load %arg17[%c0_19, %c0_20] : memref<16x128xf32, #tpu.memory_space<vmem>>, vector<16x128xf32>
    %c0_21 = arith.constant 0 : index
    %c0_22 = arith.constant 0 : index
    %17 = vector.load %arg8[%c0_21, %c0_22] : memref<128x128xbf16, #tpu.memory_space<vmem>>, vector<128x128xbf16>
    %cst_23 = arith.constant dense<0.000000e+00> : vector<16x128xf32>
    %18 = tpu.matmul %5, %17, %cst_23 {dimension_numbers = #tpu.dot_dimension_numbers<[1], [0], [0], [1], [0, 0, 1, 1], [], []>} : vector<16x128xbf16>, vector<128x128xbf16>, vector<16x128xf32> -> vector<16x128xf32>
    %19 = arith.addf %16, %18 : vector<16x128xf32>
    %c0_24 = arith.constant 0 : index
    %c0_25 = arith.constant 0 : index
    %20 = vector.load %arg17[%c0_24, %c0_25] : memref<16x128xf32, #tpu.memory_space<vmem>>, vector<16x128xf32>
    tpu.vector_store %arg17[%c0_24, %c0_25], %19 {strides = array<i32>} : memref<16x128xf32, #tpu.memory_space<vmem>>, vector<16x128xf32>,
    %c1_i32 = arith.constant 1 : i32
    %21 = arith.cmpi eq, %arg2, %c1_i32 : i32
    %22 = arith.extui %21 : i1 to i32
    %c0_i32_26 = arith.constant 0 : i32
    %23 = arith.cmpi ne, %22, %c0_i32_26 : i32
    scf.if %23 {
      %c0_27 = arith.constant 0 : index
      %c0_28 = arith.constant 0 : index
      %24 = vector.load %arg15[%c0_27, %c0_28] : memref<16x128xf32, #tpu.memory_space<vmem>>, vector<16x128xf32>
      %c0_29 = arith.constant 0 : index
      %c0_30 = arith.constant 0 : index
      %25 = vector.load %arg9[%c0_29, %c0_30] : memref<1x128xf32, #tpu.memory_space<vmem>>, vector<1x128xf32>
      %26 = vector.broadcast %25 : vector<1x128xf32> to vector<16x128xf32>
      %27 = arith.addf %24, %26 : vector<16x128xf32>
      %cst_31 = arith.constant 1.250000e-01 : f32
      %28 = vector.broadcast %cst_31 : f32 to vector<16x128xf32>
      %29 = arith.mulf %27, %28 : vector<16x128xf32>
      %30 = arith.truncf %29 : vector<16x128xf32> to vector<16x128xbf16>
      %c0_32 = arith.constant 0 : index
      %c0_33 = arith.constant 0 : index
      %31 = vector.load %arg12[%c0_32, %c0_33] : memref<16x128xbf16, #tpu.memory_space<vmem>>, vector<16x128xbf16>
      tpu.vector_store %arg12[%c0_32, %c0_33], %30 {strides = array<i32>} : memref<16x128xbf16, #tpu.memory_space<vmem>>, vector<16x128xbf16>,
      %c0_34 = arith.constant 0 : index
      %c0_35 = arith.constant 0 : index
      %32 = vector.load %arg16[%c0_34, %c0_35] : memref<16x128xf32, #tpu.memory_space<vmem>>, vector<16x128xf32>
      %c0_36 = arith.constant 0 : index
      %c0_37 = arith.constant 0 : index
      %33 = vector.load %arg10[%c0_36, %c0_37] : memref<1x128xf32, #tpu.memory_space<vmem>>, vector<1x128xf32>
      %34 = vector.broadcast %33 : vector<1x128xf32> to vector<16x128xf32>
      %35 = arith.addf %32, %34 : vector<16x128xf32>
      %36 = arith.truncf %35 : vector<16x128xf32> to vector<16x128xbf16>
      %c0_38 = arith.constant 0 : index
      %c0_39 = arith.constant 0 : index
      %37 = vector.load %arg13[%c0_38, %c0_39] : memref<16x128xbf16, #tpu.memory_space<vmem>>, vector<16x128xbf16>
      tpu.vector_store %arg13[%c0_38, %c0_39], %36 {strides = array<i32>} : memref<16x128xbf16, #tpu.memory_space<vmem>>, vector<16x128xbf16>,
      %c0_40 = arith.constant 0 : index
      %c0_41 = arith.constant 0 : index
      %38 = vector.load %arg17[%c0_40, %c0_41] : memref<16x128xf32, #tpu.memory_space<vmem>>, vector<16x128xf32>
      %c0_42 = arith.constant 0 : index
      %c0_43 = arith.constant 0 : index
      %39 = vector.load %arg11[%c0_42, %c0_43] : memref<1x128xf32, #tpu.memory_space<vmem>>, vector<1x128xf32>
      %40 = vector.broadcast %39 : vector<1x128xf32> to vector<16x128xf32>
      %41 = arith.addf %38, %40 : vector<16x128xf32>
      %42 = arith.truncf %41 : vector<16x128xf32> to vector<16x128xbf16>
      %c0_44 = arith.constant 0 : index
      %c0_45 = arith.constant 0 : index
      %43 = vector.load %arg14[%c0_44, %c0_45] : memref<16x128xbf16, #tpu.memory_space<vmem>>, vector<16x128xbf16>
      tpu.vector_store %arg14[%c0_44, %c0_45], %42 {strides = array<i32>} : memref<16x128xbf16, #tpu.memory_space<vmem>>, vector<16x128xbf16>,
    } else {
    }
    return
  }
  func.func @transform_0(%arg0: i32, %arg1: i32, %arg2: i32) -> (i32, i32) {
    %c0_i32 = arith.constant 0 : i32
    return %arg0, %arg2 : i32, i32
  }
  func.func @transform_1(%arg0: i32, %arg1: i32, %arg2: i32) -> (i32, i32) {
    %c0_i32 = arith.constant 0 : i32
    return %arg0, %arg2 : i32, i32
  }
  func.func @transform_2(%arg0: i32, %arg1: i32, %arg2: i32) -> (i32, i32) {
    %c0_i32 = arith.constant 0 : i32
    return %arg0, %arg2 : i32, i32
  }
  func.func @transform_3(%arg0: i32, %arg1: i32, %arg2: i32) -> (i32, i32) {
    %c0_i32 = arith.constant 0 : i32
    return %arg2, %arg1 : i32, i32
  }
  func.func @transform_4(%arg0: i32, %arg1: i32, %arg2: i32) -> (i32, i32) {
    %c0_i32 = arith.constant 0 : i32
    return %arg2, %arg1 : i32, i32
  }
  func.func @transform_5(%arg0: i32, %arg1: i32, %arg2: i32) -> (i32, i32) {
    %c0_i32 = arith.constant 0 : i32
    return %arg2, %arg1 : i32, i32
  }
  func.func @transform_6(%arg0: i32, %arg1: i32, %arg2: i32) -> (i32, i32) {
    %c0_i32 = arith.constant 0 : i32
    %c0_i32_0 = arith.constant 0 : i32
    return %c0_i32, %arg1 : i32, i32
  }
  func.func @transform_7(%arg0: i32, %arg1: i32, %arg2: i32) -> (i32, i32) {
    %c0_i32 = arith.constant 0 : i32
    %c0_i32_0 = arith.constant 0 : i32
    return %c0_i32, %arg1 : i32, i32
  }
  func.func @transform_8(%arg0: i32, %arg1: i32, %arg2: i32) -> (i32, i32) {
    %c0_i32 = arith.constant 0 : i32
    %c0_i32_0 = arith.constant 0 : i32
    return %c0_i32, %arg1 : i32, i32
  }
  func.func @transform_9(%arg0: i32, %arg1: i32, %arg2: i32) -> (i32, i32) {
    %c0_i32 = arith.constant 0 : i32
    return %arg0, %arg1 : i32, i32
  }
  func.func @transform_10(%arg0: i32, %arg1: i32, %arg2: i32) -> (i32, i32) {
    %c0_i32 = arith.constant 0 : i32
    return %arg0, %arg1 : i32, i32
  }
  func.func @transform_11(%arg0: i32, %arg1: i32, %arg2: i32) -> (i32, i32) {
    %c0_i32 = arith.constant 0 : i32
    return %arg0, %arg1 : i32, i32
  }
}

</mosaic_0001>

<llo_original>
// kernel: tpu_custom_call.1
$region0: #{tpu_custom_call.1}
  #allocation0 [shape = 'u32[]', space=smem, size = 0x4, offset = 0x4, fixed_abs, tag = 'smem constant byte address 0x4 - core index']
  #allocation1 [shape = 'u32[72,128]{1,0:T(1,128)}', space=vmem, size = 0x9000, scoped, tag = 'internal scratch']
  #allocation2 [shape = 'f32[16,128]{1,0:T(8,128)}', space=vmem, size = 0x2000, scoped, tag = 'scratch operand']
  #allocation3 [shape = 'f32[16,128]{1,0:T(8,128)}', space=vmem, size = 0x2000, scoped, tag = 'scratch operand']
  #allocation4 [shape = 'f32[16,128]{1,0:T(8,128)}', space=vmem, size = 0x2000, scoped, tag = 'scratch operand']
  %s0 = inlined_call_operand.hbm [shape: bf16[64,256], index: 0, kind: input, shape index: {}]
  %s1 = inlined_call_operand.hbm [shape: bf16[64,256], index: 1, kind: input, shape index: {}]
  %s2 = inlined_call_operand.hbm [shape: bf16[64,256], index: 2, kind: input, shape index: {}]
  %s3 = inlined_call_operand.hbm [shape: bf16[256,256], index: 3, kind: input, shape index: {}]
  %s4 = inlined_call_operand.hbm [shape: bf16[256,256], index: 4, kind: input, shape index: {}]
  %s5 = inlined_call_operand.hbm [shape: bf16[256,256], index: 5, kind: input, shape index: {}]
  %s6 = inlined_call_operand.vmem [shape: f32[1,256], index: 6, kind: input, shape index: {}]
  %s7 = inlined_call_operand.vmem [shape: f32[1,256], index: 7, kind: input, shape index: {}]
  %s8 = inlined_call_operand.vmem [shape: f32[1,256], index: 8, kind: input, shape index: {}]
  %s9 = inlined_call_operand.hbm [shape: bf16[64,256], index: 9, kind: output, shape index: {0}]
  %s10 = inlined_call_operand.hbm [shape: bf16[64,256], index: 10, kind: output, shape index: {1}]
  %s11 = inlined_call_operand.hbm [shape: bf16[64,256], index: 11, kind: output, shape index: {2}]
  %12 = xla_tuple %s9, %s10, %s11
  %s13 = sld [smem:[#allocation0]]
  $region117: #{tpu_custom_call.1} parent=0
    _
  %s15 = ssub.s32 1, %s13
  %s16 = scalar_select 0, %s15, %s13
  $region1: #{tpu_custom_call.1} parent=0
    #allocation5 [shape = 'u8[8192]{0}', space=vmem, size = 0x2000, scoped, tag = 'input window, operand 0']
    #allocation6 [shape = 's32[2]{0}', space=sflag, size = 0x8, scoped, tag = 'scoped memory for tpu_custom_call.1']
    #allocation7 [shape = 's32[2]{0}', space=sflag, size = 0x8, scoped, tag = 'scoped memory for tpu_custom_call.1']
    #allocation8 [shape = 'u8[8192]{0}', space=vmem, size = 0x2000, scoped, tag = 'input window, operand 1']
    #allocation9 [shape = 's32[2]{0}', space=sflag, size = 0x8, scoped, tag = 'scoped memory for tpu_custom_call.1']
    #allocation10 [shape = 'u8[8192]{0}', space=vmem, size = 0x2000, scoped, tag = 'input window, operand 2']
    #allocation11 [shape = 'u8[65536]{0}', space=vmem, size = 0x10000, scoped, tag = 'input window, operand 3']
    #allocation12 [shape = 's32[2]{0}', space=sflag, size = 0x8, scoped, tag = 'scoped memory for tpu_custom_call.1']
    #allocation13 [shape = 'u8[65536]{0}', space=vmem, size = 0x10000, scoped, tag = 'input window, operand 4']
    #allocation14 [shape = 'u8[65536]{0}', space=vmem, size = 0x10000, scoped, tag = 'input window, operand 5']
    #allocation15 [shape = 's32[2]{0}', space=sflag, size = 0x8, scoped, tag = 'scoped memory for tpu_custom_call.1']
    #allocation16 [shape = 'u8[8192]{0}', space=vmem, size = 0x2000, scoped, tag = 'output window, operand 0']
    #allocation17 [shape = 'u8[8192]{0}', space=vmem, size = 0x2000, scoped, tag = 'output window, operand 1']
    #allocation18 [shape = 's32[2]{0}', space=sflag, size = 0x8, scoped, tag = 'scoped memory for tpu_custom_call.1']
    #allocation19 [shape = 'u8[8192]{0}', space=vmem, size = 0x2000, scoped, tag = 'output window, operand 2']
    %17 = vsyncpa [#allocation6], 0
    %s18 = scalar_lea.sflag [#allocation6], 1
    %19 = vsyncpa %s18, 0
    %20 = vsyncpa [#allocation9], 0
    %s21 = scalar_lea.sflag [#allocation9], 1
    %22 = vsyncpa %s21, 0
    %23 = vsyncpa [#allocation12], 0
    %s24 = scalar_lea.sflag [#allocation12], 1
    %25 = vsyncpa %s24, 0
    %26 = vsyncpa [#allocation15], 0
    %s27 = scalar_lea.sflag [#allocation15], 1
    %28 = vsyncpa %s27, 0
    %29 = vsyncpa [#allocation7], 0
    %s30 = scalar_lea.sflag [#allocation7], 1
    %31 = vsyncpa %s30, 0
    %32 = vsyncpa [#allocation18], 0
    %s33 = scalar_lea.sflag [#allocation18], 1
    %34 = vsyncpa %s33, 0
    loop: start=0, step=1, limit=18
    $region2: #{tpu_custom_call.1} parent=1 // loop_pre_header
      _
    $region3: #{tpu_custom_call.1} parent=1 // loop_header
      %s36 = sphi 0, %s40
      %p37 = scmp.ge.s32.totalorder %s36, 18
      %s43 = sphi 0, %s62
      %s44 = sphi 0, %s58
      %s45 = sphi 0, %s54
      %s46 = sphi 0, %s43
      %s47 = sphi 0, %s44
      %s48 = sphi 0, %s45
      %s49 = sphi 0, %s46
      %s50 = sphi 0, %s47
      %s51 = sphi 0, %s48
      %s67 = sphi 0, %s69
      %s70 = sphi 0, %s67
      %s71 = sphi 0, %s70
      %s87 = sphi 0, %s71
      %s95 = sphi 0, %s97
      %s98 = sphi 0, %s95
      %s99 = sphi 0, %s98
      %s115 = sphi 0, %s99
      %s123 = sphi 0, %s125
      %s126 = sphi 0, %s123
      %s127 = sphi 0, %s126
      %s143 = sphi 0, %s127
      %s151 = sphi 0, %s153
      %s154 = sphi 0, %s151
      %s155 = sphi 0, %s154
      %s171 = sphi 0, %s155
      %s179 = sphi 0, %s181
      %s182 = sphi 0, %s179
      %s183 = sphi 0, %s182
      %s199 = sphi 0, %s183
      %s207 = sphi 0, %s209
      %s210 = sphi 0, %s207
      %s211 = sphi 0, %s210
      %s227 = sphi 0, %s211
      %s233 = sphi 0, %s235
      %s236 = sphi 0, %s233
      %s237 = sphi 0, %s236
      %s253 = sphi 0, %s237
      %s259 = sphi 0, %s261
      %s262 = sphi 0, %s259
      %s263 = sphi 0, %s262
      %s279 = sphi 0, %s263
      %s285 = sphi 0, %s287
      %s288 = sphi 0, %s285
      %s289 = sphi 0, %s288
      %s305 = sphi 0, %s289
      %s313 = sphi 0, %s315
      %s316 = sphi 0, %s313
      %s317 = sphi 0, %s316
      %s333 = sphi 0, %s317
      %s341 = sphi 0, %s343
      %s344 = sphi 0, %s341
      %s345 = sphi 0, %s344
      %s361 = sphi 0, %s345
      %s369 = sphi 0, %s371
      %s372 = sphi 0, %s369
      %s373 = sphi 0, %s372
      %s389 = sphi 0, %s373
    $region4: #{tpu_custom_call.1} parent=1 // loop_header_branch
      %39 = sbr.rel (%p37) target = $region8
    $region5: #{tpu_custom_call.1} parent=1 // loop_body
      %s41 = ssub.s32 %s36, 1
      %s42 = ssub.s32 %s36, 2
      %s52 = sadd.s32 1, %s45
      %p53 = scmp.ge.s32.totalorder %s52, 2
      %s54 = scalar_select %p53, 0, %s52
      %s55 = sadd.s32 1, %s44
      %s56 = scalar_select %p53, %s55, %s44
      %p57 = scmp.ge.s32.totalorder %s56, 2
      %s58 = scalar_select %p57, 0, %s56
      %s59 = sadd.s32 1, %s43
      %s60 = scalar_select %p57, %s59, %s43
      %p61 = scmp.ge.s32.totalorder %s60, 4
      %s62 = scalar_select %p61, 0, %s60
      %s63 = ssub.s32 %s43, %s62
      %s64 = ssub.s32 %s45, %s54
      %s65 = sor.u32 %s63, %s64
      %p66 = scmp.eq.s32.totalorder %s65, 0
      %s68 = sadd.s32 %s67, 1
      %s69 = scalar_select %p66, %s67, %s68
      %p72 = pneg %p66
      %p73 = scmp.eq.s32.totalorder %s36, 15
      %p74 = por %p72, %p73
      %p75 = scmp.ne.s32.totalorder %s67, %s70
      %p76 = scmp.eq.s32.totalorder %s36, 0
      %p77 = por %p75, %p76
      %p78 = scmp.ne.s32.totalorder %s67, %s70
      %p79 = scmp.eq.s32.totalorder %s41, 15
      %p80 = por %p78, %p79
      %p81 = scmp.ne.s32.totalorder %s70, %s71
      %p82 = scmp.eq.s32.totalorder %s41, 0
      %p83 = por %p81, %p82
      %p84 = scmp.ne.s32.totalorder %s70, %s71
      %p85 = scmp.eq.s32.totalorder %s42, 15
      %p86 = por %p84, %p85
      %p88 = scmp.ne.s32.totalorder %s71, %s87
      %p89 = scmp.eq.s32.totalorder %s42, 0
      %p90 = por %p88, %p89
      %s91 = ssub.s32 %s43, %s62
      %s92 = ssub.s32 %s45, %s54
      %s93 = sor.u32 %s91, %s92
      %p94 = scmp.eq.s32.totalorder %s93, 0
      %s96 = sadd.s32 %s95, 1
      %s97 = scalar_select %p94, %s95, %s96
      %p100 = pneg %p94
      %p101 = scmp.eq.s32.totalorder %s36, 15
      %p102 = por %p100, %p101
      %p103 = scmp.ne.s32.totalorder %s95, %s98
      %p104 = scmp.eq.s32.totalorder %s36, 0
      %p105 = por %p103, %p104
      %p106 = scmp.ne.s32.totalorder %s95, %s98
      %p107 = scmp.eq.s32.totalorder %s41, 15
      %p108 = por %p106, %p107
      %p109 = scmp.ne.s32.totalorder %s98, %s99
      %p110 = scmp.eq.s32.totalorder %s41, 0
      %p111 = por %p109, %p110
      %p112 = scmp.ne.s32.totalorder %s98, %s99
      %p113 = scmp.eq.s32.totalorder %s42, 15
      %p114 = por %p112, %p113
      %p116 = scmp.ne.s32.totalorder %s99, %s115
      %p117 = scmp.eq.s32.totalorder %s42, 0
      %p118 = por %p116, %p117
      %s119 = ssub.s32 %s43, %s62
      %s120 = ssub.s32 %s45, %s54
      %s121 = sor.u32 %s119, %s120
      %p122 = scmp.eq.s32.totalorder %s121, 0
      %s124 = sadd.s32 %s123, 1
      %s125 = scalar_select %p122, %s123, %s124
      %p128 = pneg %p122
      %p129 = scmp.eq.s32.totalorder %s36, 15
      %p130 = por %p128, %p129
      %p131 = scmp.ne.s32.totalorder %s123, %s126
      %p132 = scmp.eq.s32.totalorder %s36, 0
      %p133 = por %p131, %p132
      %p134 = scmp.ne.s32.totalorder %s123, %s126
      %p135 = scmp.eq.s32.totalorder %s41, 15
      %p136 = por %p134, %p135
      %p137 = scmp.ne.s32.totalorder %s126, %s127
      %p138 = scmp.eq.s32.totalorder %s41, 0
      %p139 = por %p137, %p138
      %p140 = scmp.ne.s32.totalorder %s126, %s127
      %p141 = scmp.eq.s32.totalorder %s42, 15
      %p142 = por %p140, %p141
      %p144 = scmp.ne.s32.totalorder %s127, %s143
      %p145 = scmp.eq.s32.totalorder %s42, 0
      %p146 = por %p144, %p145
      %s147 = ssub.s32 %s45, %s54
      %s148 = ssub.s32 %s44, %s58
      %s149 = sor.u32 %s147, %s148
      %p150 = scmp.eq.s32.totalorder %s149, 0
      %s152 = sadd.s32 %s151, 1
      %s153 = scalar_select %p150, %s151, %s152
      %p156 = pneg %p150
      %p157 = scmp.eq.s32.totalorder %s36, 15
      %p158 = por %p156, %p157
      %p159 = scmp.ne.s32.totalorder %s151, %s154
      %p160 = scmp.eq.s32.totalorder %s36, 0
      %p161 = por %p159, %p160
      %p162 = scmp.ne.s32.totalorder %s151, %s154
      %p163 = scmp.eq.s32.totalorder %s41, 15
      %p164 = por %p162, %p163
      %p165 = scmp.ne.s32.totalorder %s154, %s155
      %p166 = scmp.eq.s32.totalorder %s41, 0
      %p167 = por %p165, %p166
      %p168 = scmp.ne.s32.totalorder %s154, %s155
      %p169 = scmp.eq.s32.totalorder %s42, 15
      %p170 = por %p168, %p169
      %p172 = scmp.ne.s32.totalorder %s155, %s171
      %p173 = scmp.eq.s32.totalorder %s42, 0
      %p174 = por %p172, %p173
      %s175 = ssub.s32 %s45, %s54
      %s176 = ssub.s32 %s44, %s58
      %s177 = sor.u32 %s175, %s176
      %p178 = scmp.eq.s32.totalorder %s177, 0
      %s180 = sadd.s32 %s179, 1
      %s181 = scalar_select %p178, %s179, %s180
      %p184 = pneg %p178
      %p185 = scmp.eq.s32.totalorder %s36, 15
      %p186 = por %p184, %p185
      %p187 = scmp.ne.s32.totalorder %s179, %s182
      %p188 = scmp.eq.s32.totalorder %s36, 0
      %p189 = por %p187, %p188
      %p190 = scmp.ne.s32.totalorder %s179, %s182
      %p191 = scmp.eq.s32.totalorder %s41, 15
      %p192 = por %p190, %p191
      %p193 = scmp.ne.s32.totalorder %s182, %s183
      %p194 = scmp.eq.s32.totalorder %s41, 0
      %p195 = por %p193, %p194
      %p196 = scmp.ne.s32.totalorder %s182, %s183
      %p197 = scmp.eq.s32.totalorder %s42, 15
      %p198 = por %p196, %p197
      %p200 = scmp.ne.s32.totalorder %s183, %s199
      %p201 = scmp.eq.s32.totalorder %s42, 0
      %p202 = por %p200, %p201
      %s203 = ssub.s32 %s45, %s54
      %s204 = ssub.s32 %s44, %s58
      %s205 = sor.u32 %s203, %s204
      %p206 = scmp.eq.s32.totalorder %s205, 0
      %s208 = sadd.s32 %s207, 1
      %s209 = scalar_select %p206, %s207, %s208
      %p212 = pneg %p206
      %p213 = scmp.eq.s32.totalorder %s36, 15
      %p214 = por %p212, %p213
      %p215 = scmp.ne.s32.totalorder %s207, %s210
      %p216 = scmp.eq.s32.totalorder %s36, 0
      %p217 = por %p215, %p216
      %p218 = scmp.ne.s32.totalorder %s207, %s210
      %p219 = scmp.eq.s32.totalorder %s41, 15
      %p220 = por %p218, %p219
      %p221 = scmp.ne.s32.totalorder %s210, %s211
      %p222 = scmp.eq.s32.totalorder %s41, 0
      %p223 = por %p221, %p222
      %p224 = scmp.ne.s32.totalorder %s210, %s211
      %p225 = scmp.eq.s32.totalorder %s42, 15
      %p226 = por %p224, %p225
      %p228 = scmp.ne.s32.totalorder %s211, %s227
      %p229 = scmp.eq.s32.totalorder %s42, 0
      %p230 = por %p228, %p229
      %s231 = ssub.s32 %s44, %s58
      %p232 = scmp.eq.s32.totalorder %s231, 0
      %s234 = sadd.s32 %s233, 1
      %s235 = scalar_select %p232, %s233, %s234
      %p238 = pneg %p232
      %p239 = scmp.eq.s32.totalorder %s36, 15
      %p240 = por %p238, %p239
      %p241 = scmp.ne.s32.totalorder %s233, %s236
      %p242 = scmp.eq.s32.totalorder %s36, 0
      %p243 = por %p241, %p242
      %p244 = scmp.ne.s32.totalorder %s233, %s236
      %p245 = scmp.eq.s32.totalorder %s41, 15
      %p246 = por %p244, %p245
      %p247 = scmp.ne.s32.totalorder %s236, %s237
      %p248 = scmp.eq.s32.totalorder %s41, 0
      %p249 = por %p247, %p248
      %p250 = scmp.ne.s32.totalorder %s236, %s237
      %p251 = scmp.eq.s32.totalorder %s42, 15
      %p252 = por %p250, %p251
      %p254 = scmp.ne.s32.totalorder %s237, %s253
      %p255 = scmp.eq.s32.totalorder %s42, 0
      %p256 = por %p254, %p255
      %s257 = ssub.s32 %s44, %s58
      %p258 = scmp.eq.s32.totalorder %s257, 0
      %s260 = sadd.s32 %s259, 1
      %s261 = scalar_select %p258, %s259, %s260
      %p264 = pneg %p258
      %p265 = scmp.eq.s32.totalorder %s36, 15
      %p266 = por %p264, %p265
      %p267 = scmp.ne.s32.totalorder %s259, %s262
      %p268 = scmp.eq.s32.totalorder %s36, 0
      %p269 = por %p267, %p268
      %p270 = scmp.ne.s32.totalorder %s259, %s262
      %p271 = scmp.eq.s32.totalorder %s41, 15
      %p272 = por %p270, %p271
      %p273 = scmp.ne.s32.totalorder %s262, %s263
      %p274 = scmp.eq.s32.totalorder %s41, 0
      %p275 = por %p273, %p274
      %p276 = scmp.ne.s32.totalorder %s262, %s263
      %p277 = scmp.eq.s32.totalorder %s42, 15
      %p278 = por %p276, %p277
      %p280 = scmp.ne.s32.totalorder %s263, %s279
      %p281 = scmp.eq.s32.totalorder %s42, 0
      %p282 = por %p280, %p281
      %s283 = ssub.s32 %s44, %s58
      %p284 = scmp.eq.s32.totalorder %s283, 0
      %s286 = sadd.s32 %s285, 1
      %s287 = scalar_select %p284, %s285, %s286
      %p290 = pneg %p284
      %p291 = scmp.eq.s32.totalorder %s36, 15
      %p292 = por %p290, %p291
      %p293 = scmp.ne.s32.totalorder %s285, %s288
      %p294 = scmp.eq.s32.totalorder %s36, 0
      %p295 = por %p293, %p294
      %p296 = scmp.ne.s32.totalorder %s285, %s288
      %p297 = scmp.eq.s32.totalorder %s41, 15
      %p298 = por %p296, %p297
      %p299 = scmp.ne.s32.totalorder %s288, %s289
      %p300 = scmp.eq.s32.totalorder %s41, 0
      %p301 = por %p299, %p300
      %p302 = scmp.ne.s32.totalorder %s288, %s289
      %p303 = scmp.eq.s32.totalorder %s42, 15
      %p304 = por %p302, %p303
      %p306 = scmp.ne.s32.totalorder %s289, %s305
      %p307 = scmp.eq.s32.totalorder %s42, 0
      %p308 = por %p306, %p307
      %s309 = ssub.s32 %s43, %s62
      %s310 = ssub.s32 %s44, %s58
      %s311 = sor.u32 %s309, %s310
      %p312 = scmp.eq.s32.totalorder %s311, 0
      %s314 = sadd.s32 %s313, 1
      %s315 = scalar_select %p312, %s313, %s314
      %p318 = pneg %p312
      %p319 = scmp.eq.s32.totalorder %s36, 15
      %p320 = por %p318, %p319
      %p321 = scmp.ne.s32.totalorder %s313, %s316
      %p322 = scmp.eq.s32.totalorder %s36, 0
      %p323 = por %p321, %p322
      %p324 = scmp.ne.s32.totalorder %s313, %s316
      %p325 = scmp.eq.s32.totalorder %s41, 15
      %p326 = por %p324, %p325
      %p327 = scmp.ne.s32.totalorder %s316, %s317
      %p328 = scmp.eq.s32.totalorder %s41, 0
      %p329 = por %p327, %p328
      %p330 = scmp.ne.s32.totalorder %s316, %s317
      %p331 = scmp.eq.s32.totalorder %s42, 15
      %p332 = por %p330, %p331
      %p334 = scmp.ne.s32.totalorder %s317, %s333
      %p335 = scmp.eq.s32.totalorder %s42, 0
      %p336 = por %p334, %p335
      %s337 = ssub.s32 %s43, %s62
      %s338 = ssub.s32 %s44, %s58
      %s339 = sor.u32 %s337, %s338
      %p340 = scmp.eq.s32.totalorder %s339, 0
      %s342 = sadd.s32 %s341, 1
      %s343 = scalar_select %p340, %s341, %s342
      %p346 = pneg %p340
      %p347 = scmp.eq.s32.totalorder %s36, 15
      %p348 = por %p346, %p347
      %p349 = scmp.ne.s32.totalorder %s341, %s344
      %p350 = scmp.eq.s32.totalorder %s36, 0
      %p351 = por %p349, %p350
      %p352 = scmp.ne.s32.totalorder %s341, %s344
      %p353 = scmp.eq.s32.totalorder %s41, 15
      %p354 = por %p352, %p353
      %p355 = scmp.ne.s32.totalorder %s344, %s345
      %p356 = scmp.eq.s32.totalorder %s41, 0
      %p357 = por %p355, %p356
      %p358 = scmp.ne.s32.totalorder %s344, %s345
      %p359 = scmp.eq.s32.totalorder %s42, 15
      %p360 = por %p358, %p359
      %p362 = scmp.ne.s32.totalorder %s345, %s361
      %p363 = scmp.eq.s32.totalorder %s42, 0
      %p364 = por %p362, %p363
      %s365 = ssub.s32 %s43, %s62
      %s366 = ssub.s32 %s44, %s58
      %s367 = sor.u32 %s365, %s366
      %p368 = scmp.eq.s32.totalorder %s367, 0
      %s370 = sadd.s32 %s369, 1
      %s371 = scalar_select %p368, %s369, %s370
      %p374 = pneg %p368
      %p375 = scmp.eq.s32.totalorder %s36, 15
      %p376 = por %p374, %p375
      %p377 = scmp.ne.s32.totalorder %s369, %s372
      %p378 = scmp.eq.s32.totalorder %s36, 0
      %p379 = por %p377, %p378
      %p380 = scmp.ne.s32.totalorder %s369, %s372
      %p381 = scmp.eq.s32.totalorder %s41, 15
      %p382 = por %p380, %p381
      %p383 = scmp.ne.s32.totalorder %s372, %s373
      %p384 = scmp.eq.s32.totalorder %s41, 0
      %p385 = por %p383, %p384
      %p386 = scmp.ne.s32.totalorder %s372, %s373
      %p387 = scmp.eq.s32.totalorder %s42, 15
      %p388 = por %p386, %p387
      %p390 = scmp.ne.s32.totalorder %s373, %s389
      %p391 = scmp.eq.s32.totalorder %s42, 0
      %p392 = por %p390, %p391
      %p393 = scmp.le.s32.totalorder 1, %s36
      %p394 = scmp.lt.s32.totalorder %s36, 17
      %p395 = pnand %p393, %p394
      %p396 = pneg %p395
      // Predicated region
      $region9: #{tpu_custom_call.1} parent=5 // pred_check
        _
      $region10: #{tpu_custom_call.1} parent=5 // pred_check_branch
        %398 = sbr.rel (%p395) target = $region12
      $region11: #{tpu_custom_call.1} parent=5 // pred_region
        %s399 = ssub.s32 %s36, 1
      $region12: #{tpu_custom_call.1} parent=5 // pred_fallthru
        _
      %p400 = scmp.lt.s32.totalorder %s36, 16
      // Predicated region
      $region13: #{tpu_custom_call.1} parent=5 // pred_check
        %p401 = pneg %p400
      $region14: #{tpu_custom_call.1} parent=5 // pred_check_branch
        %403 = sbr.rel (%p401) target = $region16
      $region15: #{tpu_custom_call.1} parent=5 // pred_region
        // Predicated region
        $region17: #{tpu_custom_call.1} parent=15 // pred_check
          %p404 = pneg %p77
        $region18: #{tpu_custom_call.1} parent=15 // pred_check_branch
          %406 = sbr.rel (%p404) target = $region20
        $region19: #{tpu_custom_call.1} parent=15 // pred_region
          %s407 = sand.u32 %s67, 1
          %s408 = scalar_lea.sflag [#allocation6], %s407
          %s409 = sand.u32 %s67, 1
          %s410 = smul.addr %s409, 8
          %s411 = scalar_lea.vmem [#allocation5], %s410
          %s412 = smul.u32 2, %s43
          %414 = vsyncadd %s408, 0
          %s415 = smul.addr %s412, 2
          %s416 = sadd.s32 %s45, %s415
          %s417 = smul.addr %s416, 4
          %s418 = scalar_lea.hbm %s0, %s417
          %s419 = sshll.u32 %s418, 4
          %s420 = int_to_ptr.hbm [resolvable:$true] %s419
          %s421 = sshll.u32 %s411, 4
          %s422 = int_to_ptr.vmem [resolvable:$true] %s421
          %427 = dma.hbm_to_vmem [thread:$0]  %s420, 128, %s422, %s408, 128, 64, 4
        $region20: #{tpu_custom_call.1} parent=15 // pred_fallthru
          _
        // Predicated region
        $region21: #{tpu_custom_call.1} parent=15 // pred_check
          %p428 = pneg %p105
        $region22: #{tpu_custom_call.1} parent=15 // pred_check_branch
          %430 = sbr.rel (%p428) target = $region24
        $region23: #{tpu_custom_call.1} parent=15 // pred_region
          %s431 = sand.u32 %s36, 1
          %s432 = scalar_lea.sflag [#allocation9], %s431
          %s433 = sand.u32 %s95, 1
          %s434 = smul.addr %s433, 8
          %s435 = scalar_lea.vmem [#allocation8], %s434
          %s436 = smul.u32 2, %s43
          %438 = vsyncadd %s432, 0
          %s439 = smul.addr %s436, 2
          %s440 = sadd.s32 %s45, %s439
          %s441 = smul.addr %s440, 4
          %s442 = scalar_lea.hbm %s1, %s441
          %s443 = sshll.u32 %s442, 4
          %s444 = int_to_ptr.hbm [resolvable:$true] %s443
          %s445 = sshll.u32 %s435, 4
          %s446 = int_to_ptr.vmem [resolvable:$true] %s445
          %451 = dma.hbm_to_vmem [thread:$0]  %s444, 128, %s446, %s432, 128, 64, 4
        $region24: #{tpu_custom_call.1} parent=15 // pred_fallthru
          _
        // Predicated region
        $region25: #{tpu_custom_call.1} parent=15 // pred_check
          %p452 = pneg %p133
        $region26: #{tpu_custom_call.1} parent=15 // pred_check_branch
          %454 = sbr.rel (%p452) target = $region28
        $region27: #{tpu_custom_call.1} parent=15 // pred_region
          %s455 = sand.u32 %s36, 1
          %s456 = scalar_lea.sflag [#allocation9], %s455
          %s457 = sand.u32 %s123, 1
          %s458 = smul.addr %s457, 8
          %s459 = scalar_lea.vmem [#allocation10], %s458
          %s460 = smul.u32 2, %s43
          %462 = vsyncadd %s456, 0
          %s463 = smul.addr %s460, 2
          %s464 = sadd.s32 %s45, %s463
          %s465 = smul.addr %s464, 4
          %s466 = scalar_lea.hbm %s2, %s465
          %s467 = sshll.u32 %s466, 4
          %s468 = int_to_ptr.hbm [resolvable:$true] %s467
          %s469 = sshll.u32 %s459, 4
          %s470 = int_to_ptr.vmem [resolvable:$true] %s469
          %475 = dma.hbm_to_vmem [thread:$0]  %s468, 128, %s470, %s456, 128, 64, 4
        $region28: #{tpu_custom_call.1} parent=15 // pred_fallthru
          _
        // Predicated region
        $region29: #{tpu_custom_call.1} parent=15 // pred_check
          %p476 = pneg %p161
        $region30: #{tpu_custom_call.1} parent=15 // pred_check_branch
          %478 = sbr.rel (%p476) target = $region32
        $region31: #{tpu_custom_call.1} parent=15 // pred_region
          %s479 = sand.u32 %s36, 1
          %s480 = scalar_lea.sflag [#allocation12], %s479
          %s481 = sand.u32 %s151, 1
          %s482 = smul.addr %s481, 64
          %s483 = scalar_lea.vmem [#allocation11], %s482
          %s484 = smul.u32 16, %s45
          %486 = vsyncadd %s480, 0
          %s487 = smul.addr %s484, 2
          %s488 = sadd.s32 %s44, %s487
          %s489 = smul.addr %s488, 4
          %s490 = scalar_lea.hbm %s3, %s489
          %s491 = sshll.u32 %s490, 4
          %s492 = int_to_ptr.hbm [resolvable:$true] %s491
          %s493 = sshll.u32 %s483, 4
          %s494 = int_to_ptr.vmem [resolvable:$true] %s493
          %499 = dma.hbm_to_vmem [thread:$0]  %s492, 1024, %s494, %s480, 128, 64, 4
        $region32: #{tpu_custom_call.1} parent=15 // pred_fallthru
          _
        // Predicated region
        $region33: #{tpu_custom_call.1} parent=15 // pred_check
          %p500 = pneg %p189
        $region34: #{tpu_custom_call.1} parent=15 // pred_check_branch
          %502 = sbr.rel (%p500) target = $region36
        $region35: #{tpu_custom_call.1} parent=15 // pred_region
          %s503 = sand.u32 %s36, 1
          %s504 = scalar_lea.sflag [#allocation12], %s503
          %s505 = sand.u32 %s179, 1
          %s506 = smul.addr %s505, 64
          %s507 = scalar_lea.vmem [#allocation13], %s506
          %s508 = smul.u32 16, %s45
          %510 = vsyncadd %s504, 0
          %s511 = smul.addr %s508, 2
          %s512 = sadd.s32 %s44, %s511
          %s513 = smul.addr %s512, 4
          %s514 = scalar_lea.hbm %s4, %s513
          %s515 = sshll.u32 %s514, 4
          %s516 = int_to_ptr.hbm [resolvable:$true] %s515
          %s517 = sshll.u32 %s507, 4
          %s518 = int_to_ptr.vmem [resolvable:$true] %s517
          %523 = dma.hbm_to_vmem [thread:$0]  %s516, 1024, %s518, %s504, 128, 64, 4
        $region36: #{tpu_custom_call.1} parent=15 // pred_fallthru
          _
        // Predicated region
        $region37: #{tpu_custom_call.1} parent=15 // pred_check
          %p524 = pneg %p217
        $region38: #{tpu_custom_call.1} parent=15 // pred_check_branch
          %526 = sbr.rel (%p524) target = $region40
        $region39: #{tpu_custom_call.1} parent=15 // pred_region
          %s527 = sand.u32 %s207, 1
          %s528 = scalar_lea.sflag [#allocation15], %s527
          %s529 = sand.u32 %s207, 1
          %s530 = smul.addr %s529, 64
          %s531 = scalar_lea.vmem [#allocation14], %s530
          %s532 = smul.u32 16, %s45
          %534 = vsyncadd %s528, 0
          %s535 = smul.addr %s532, 2
          %s536 = sadd.s32 %s44, %s535
          %s537 = smul.addr %s536, 4
          %s538 = scalar_lea.hbm %s5, %s537
          %s539 = sshll.u32 %s538, 4
          %s540 = int_to_ptr.hbm [resolvable:$true] %s539
          %s541 = sshll.u32 %s531, 4
          %s542 = int_to_ptr.vmem [resolvable:$true] %s541
          %547 = dma.hbm_to_vmem [thread:$0]  %s540, 1024, %s542, %s528, 128, 64, 4
        $region40: #{tpu_custom_call.1} parent=15 // pred_fallthru
          _
        // Predicated region
        $region41: #{tpu_custom_call.1} parent=15 // pred_check
          %p548 = pneg %p243
        $region42: #{tpu_custom_call.1} parent=15 // pred_check_branch
          %550 = sbr.rel (%p548) target = $region44
        $region43: #{tpu_custom_call.1} parent=15 // pred_region
          %p551 = scmp.lt.s32.totalorder %s44, 1
          %s552 = scalar_select %p551, %s44, 1
          %s553 = scalar_lea.vmem %s6, %s552
        $region44: #{tpu_custom_call.1} parent=15 // pred_fallthru
          _
        // Predicated region
        $region45: #{tpu_custom_call.1} parent=15 // pred_check
          %p554 = pneg %p269
        $region46: #{tpu_custom_call.1} parent=15 // pred_check_branch
          %556 = sbr.rel (%p554) target = $region48
        $region47: #{tpu_custom_call.1} parent=15 // pred_region
          %p557 = scmp.lt.s32.totalorder %s44, 1
          %s558 = scalar_select %p557, %s44, 1
          %s559 = scalar_lea.vmem %s7, %s558
        $region48: #{tpu_custom_call.1} parent=15 // pred_fallthru
          _
        // Predicated region
        $region49: #{tpu_custom_call.1} parent=15 // pred_check
          %p560 = pneg %p295
        $region50: #{tpu_custom_call.1} parent=15 // pred_check_branch
          %562 = sbr.rel (%p560) target = $region52
        $region51: #{tpu_custom_call.1} parent=15 // pred_region
          %p563 = scmp.lt.s32.totalorder %s44, 1
          %s564 = scalar_select %p563, %s44, 1
          %s565 = scalar_lea.vmem %s8, %s564
        $region52: #{tpu_custom_call.1} parent=15 // pred_fallthru
          _
      $region16: #{tpu_custom_call.1} parent=5 // pred_fallthru
        _
      %p566 = scmp.le.s32.totalorder 1, %s36
      %p567 = scmp.lt.s32.totalorder %s36, 17
      %p568 = pnand %p566, %p567
      %p569 = pneg %p568
      // Predicated region
      $region53: #{tpu_custom_call.1} parent=5 // pred_check
        _
      $region54: #{tpu_custom_call.1} parent=5 // pred_check_branch
        %571 = sbr.rel (%p568) target = $region56
      $region55: #{tpu_custom_call.1} parent=5 // pred_region
        %s572 = ssub.s32 %s36, 1
        %s573 = sand.u32 %s70, 1
        %s574 = scalar_lea.sflag [#allocation6], %s573
        %s575 = sand.u32 %s70, 1
        %s576 = smul.addr %s575, 8
        %s577 = scalar_lea.vmem [#allocation5], %s576
        // Predicated region
        $region57: #{tpu_custom_call.1} parent=55 // pred_check
          %p578 = pneg %p83
        $region58: #{tpu_custom_call.1} parent=55 // pred_check_branch
          %580 = sbr.rel (%p578) target = $region60
        $region59: #{tpu_custom_call.1} parent=55 // pred_region
          %582 = dma.done %s574, 128
        $region60: #{tpu_custom_call.1} parent=55 // pred_fallthru
          _
        %s583 = sand.u32 %s41, 1
        %s584 = scalar_lea.sflag [#allocation9], %s583
        %s585 = sand.u32 %s98, 1
        %s586 = smul.addr %s585, 8
        %s587 = scalar_lea.vmem [#allocation8], %s586
        // Predicated region
        $region61: #{tpu_custom_call.1} parent=55 // pred_check
          %p588 = pneg %p111
        $region62: #{tpu_custom_call.1} parent=55 // pred_check_branch
          %590 = sbr.rel (%p588) target = $region64
        $region63: #{tpu_custom_call.1} parent=55 // pred_region
          %592 = dma.done %s584, 128
        $region64: #{tpu_custom_call.1} parent=55 // pred_fallthru
          _
        %s593 = sand.u32 %s41, 1
        %s594 = scalar_lea.sflag [#allocation9], %s593
        %s595 = sand.u32 %s126, 1
        %s596 = smul.addr %s595, 8
        %s597 = scalar_lea.vmem [#allocation10], %s596
        // Predicated region
        $region65: #{tpu_custom_call.1} parent=55 // pred_check
          %p598 = pneg %p139
        $region66: #{tpu_custom_call.1} parent=55 // pred_check_branch
          %600 = sbr.rel (%p598) target = $region68
        $region67: #{tpu_custom_call.1} parent=55 // pred_region
          %602 = dma.done %s594, 128
        $region68: #{tpu_custom_call.1} parent=55 // pred_fallthru
          _
        %s603 = sand.u32 %s41, 1
        %s604 = scalar_lea.sflag [#allocation12], %s603
        %s605 = sand.u32 %s154, 1
        %s606 = smul.addr %s605, 64
        %s607 = scalar_lea.vmem [#allocation11], %s606
        // Predicated region
        $region69: #{tpu_custom_call.1} parent=55 // pred_check
          %p608 = pneg %p167
        $region70: #{tpu_custom_call.1} parent=55 // pred_check_branch
          %610 = sbr.rel (%p608) target = $region72
        $region71: #{tpu_custom_call.1} parent=55 // pred_region
          %612 = dma.done %s604, 1024
        $region72: #{tpu_custom_call.1} parent=55 // pred_fallthru
          _
        %s613 = sand.u32 %s41, 1
        %s614 = scalar_lea.sflag [#allocation12], %s613
        %s615 = sand.u32 %s182, 1
        %s616 = smul.addr %s615, 64
        %s617 = scalar_lea.vmem [#allocation13], %s616
        // Predicated region
        $region73: #{tpu_custom_call.1} parent=55 // pred_check
          %p618 = pneg %p195
        $region74: #{tpu_custom_call.1} parent=55 // pred_check_branch
          %620 = sbr.rel (%p618) target = $region76
        $region75: #{tpu_custom_call.1} parent=55 // pred_region
          %622 = dma.done %s614, 1024
        $region76: #{tpu_custom_call.1} parent=55 // pred_fallthru
          _
        %s623 = sand.u32 %s210, 1
        %s624 = scalar_lea.sflag [#allocation15], %s623
        %s625 = sand.u32 %s210, 1
        %s626 = smul.addr %s625, 64
        %s627 = scalar_lea.vmem [#allocation14], %s626
        // Predicated region
        $region77: #{tpu_custom_call.1} parent=55 // pred_check
          %p628 = pneg %p223
        $region78: #{tpu_custom_call.1} parent=55 // pred_check_branch
          %630 = sbr.rel (%p628) target = $region80
        $region79: #{tpu_custom_call.1} parent=55 // pred_region
          %632 = dma.done %s624, 1024
        $region80: #{tpu_custom_call.1} parent=55 // pred_fallthru
          _
        %s633 = sand.u32 %s70, 1
        %s634 = scalar_lea.sflag [#allocation6], %s633
        %s635 = sand.u32 %s70, 1
        %s636 = smul.addr %s635, 8
        %s637 = scalar_lea.vmem [#allocation5], %s636
        %p638 = pneg %p83
        %p639 = pneg %p80
        %s640 = sand.u32 %s41, 1
        %s641 = scalar_lea.sflag [#allocation9], %s640
        %s642 = sand.u32 %s98, 1
        %s643 = smul.addr %s642, 8
        %s644 = scalar_lea.vmem [#allocation8], %s643
        %p645 = pneg %p111
        %p646 = pneg %p108
        %s647 = sand.u32 %s41, 1
        %s648 = scalar_lea.sflag [#allocation9], %s647
        %s649 = sand.u32 %s126, 1
        %s650 = smul.addr %s649, 8
        %s651 = scalar_lea.vmem [#allocation10], %s650
        %p652 = pneg %p139
        %p653 = pneg %p136
        %s654 = sand.u32 %s41, 1
        %s655 = scalar_lea.sflag [#allocation12], %s654
        %s656 = sand.u32 %s154, 1
        %s657 = smul.addr %s656, 64
        %s658 = scalar_lea.vmem [#allocation11], %s657
        %p659 = pneg %p167
        %p660 = pneg %p164
        %s661 = sand.u32 %s41, 1
        %s662 = scalar_lea.sflag [#allocation12], %s661
        %s663 = sand.u32 %s182, 1
        %s664 = smul.addr %s663, 64
        %s665 = scalar_lea.vmem [#allocation13], %s664
        %p666 = pneg %p195
        %p667 = pneg %p192
        %s668 = sand.u32 %s210, 1
        %s669 = scalar_lea.sflag [#allocation15], %s668
        %s670 = sand.u32 %s210, 1
        %s671 = smul.addr %s670, 64
        %s672 = scalar_lea.vmem [#allocation14], %s671
        %p673 = pneg %p223
        %p674 = pneg %p220
        %p675 = scmp.lt.s32.totalorder %s47, 1
        %s676 = scalar_select %p675, %s47, 1
        %s677 = scalar_lea.vmem %s6, %s676
        %p678 = pneg %p249
        %p679 = pneg %p246
        %p680 = scmp.lt.s32.totalorder %s47, 1
        %s681 = scalar_select %p680, %s47, 1
        %s682 = scalar_lea.vmem %s7, %s681
        %p683 = pneg %p275
        %p684 = pneg %p272
        %p685 = scmp.lt.s32.totalorder %s47, 1
        %s686 = scalar_select %p685, %s47, 1
        %s687 = scalar_lea.vmem %s8, %s686
        %p688 = pneg %p301
        %p689 = pneg %p298
        %p690 = pneg %p329
        %p691 = pneg %p326
        %s692 = sand.u32 %s316, 1
        %s693 = scalar_lea.sflag [#allocation7], %s692
        %s694 = sand.u32 %s316, 1
        %s695 = smul.addr %s694, 8
        %s696 = scalar_lea.vmem [#allocation16], %s695
        %p697 = pneg %p357
        %p698 = pneg %p354
        %s699 = sand.u32 %s41, 1
        %s700 = scalar_lea.sflag [#allocation18], %s699
        %s701 = sand.u32 %s344, 1
        %s702 = smul.addr %s701, 8
        %s703 = scalar_lea.vmem [#allocation17], %s702
        %p704 = pneg %p385
        %p705 = pneg %p382
        %s706 = sand.u32 %s41, 1
        %s707 = scalar_lea.sflag [#allocation18], %s706
        %s708 = sand.u32 %s372, 1
        %s709 = smul.addr %s708, 8
        %s710 = scalar_lea.vmem [#allocation19], %s709
        %s711 = smul.u32 2, %s46
        %s712 = smul.u32 2, %s46
        %s713 = smul.u32 2, %s46
        %s714 = smul.u32 16, %s48
        %s715 = smul.u32 16, %s48
        %s716 = smul.u32 16, %s48
        %p717 = scmp.lt.s32.totalorder %s47, 1
        %s718 = scalar_select %p717, %s47, 1
        %s719 = scalar_lea.vmem %s6, %s718
        %p720 = scmp.lt.s32.totalorder %s47, 1
        %s721 = scalar_select %p720, %s47, 1
        %s722 = scalar_lea.vmem %s7, %s721
        %p723 = scmp.lt.s32.totalorder %s47, 1
        %s724 = scalar_select %p723, %s47, 1
        %s725 = scalar_lea.vmem %s8, %s724
        %s726 = smul.u32 2, %s46
        %s727 = smul.u32 2, %s46
        %s728 = smul.u32 2, %s46
        %p729 = scmp.eq.s32.totalorder %s48, 0
        // Predicated region
        $region81: #{tpu_custom_call.1} parent=55 // pred_check
          %p730 = pneg %p729
        $region82: #{tpu_custom_call.1} parent=55 // pred_check_branch
          %732 = sbr.rel (%p730) target = $region84
        $region83: #{tpu_custom_call.1} parent=55 // pred_region
          %733 = vst [vmem:[#allocation2] sm:$0xff] 0.0
          %734 = vst [vmem:[#allocation2 + $0x8] sm:$0xff] 0.0
          %735 = vst [vmem:[#allocation3] sm:$0xff] 0.0
          %736 = vst [vmem:[#allocation3 + $0x8] sm:$0xff] 0.0
          %737 = vst [vmem:[#allocation4] sm:$0xff] 0.0
          %738 = vst [vmem:[#allocation4 + $0x8] sm:$0xff] 0.0
        $region84: #{tpu_custom_call.1} parent=55 // pred_fallthru
          _
        %v739 = vld [vmem:[%s577] sm:$0xf]
        %v740 = vld [vmem:[%s577 + $0x4] sm:$0xf]
        %v741 = vld [vmem:[%s587] sm:$0xf]
        %v742 = vld [vmem:[%s587 + $0x4] sm:$0xf]
        %v743 = vld [vmem:[%s597] sm:$0xf]
        %v744 = vld [vmem:[%s597 + $0x4] sm:$0xf]
        %v745 = vld [vmem:[#allocation2] sm:$0xff]
        %v746 = vld [vmem:[#allocation2 + $0x8] sm:$0xff]
        %v747 = vld [vmem:[%s607] sm:$0xf]
        %v748 = vld [vmem:[%s607 + $0x4] sm:$0xf]
        %v749 = vld [vmem:[%s607 + $0x8] sm:$0xf]
        %v750 = vld [vmem:[%s607 + $0xc] sm:$0xf]
        %v751 = vld [vmem:[%s607 + $0x10] sm:$0xf]
        %v752 = vld [vmem:[%s607 + $0x14] sm:$0xf]
        %v753 = vld [vmem:[%s607 + $0x18] sm:$0xf]
        %v754 = vld [vmem:[%s607 + $0x1c] sm:$0xf]
        %v755 = vld [vmem:[%s607 + $0x20] sm:$0xf]
        %v756 = vld [vmem:[%s607 + $0x24] sm:$0xf]
        %v757 = vld [vmem:[%s607 + $0x28] sm:$0xf]
        %v758 = vld [vmem:[%s607 + $0x2c] sm:$0xf]
        %v759 = vld [vmem:[%s607 + $0x30] sm:$0xf]
        %v760 = vld [vmem:[%s607 + $0x34] sm:$0xf]
        %v761 = vld [vmem:[%s607 + $0x38] sm:$0xf]
        %v762 = vld [vmem:[%s607 + $0x3c] sm:$0xf]
        %v765 = vunpack.c.l.b16 %v739
        %v766 = vunpack.c.l.b16 %v740
        %v767 = vpack.c.b16 %v766, %v765
        %v785 = vunpack.c.l.b16 %v747
        %v786 = vunpack.c.l.b16 %v748
        %v787 = vunpack.c.l.b16 %v749
        %v788 = vunpack.c.l.b16 %v750
        %v789 = vunpack.c.l.b16 %v751
        %v790 = vunpack.c.l.b16 %v752
        %v791 = vunpack.c.l.b16 %v753
        %v792 = vunpack.c.l.b16 %v754
        %v793 = vunpack.c.l.b16 %v755
        %v794 = vunpack.c.l.b16 %v756
        %v795 = vunpack.c.l.b16 %v757
        %v796 = vunpack.c.l.b16 %v758
        %v797 = vunpack.c.l.b16 %v759
        %v798 = vunpack.c.l.b16 %v760
        %v799 = vunpack.c.l.b16 %v761
        %v800 = vunpack.c.l.b16 %v762
        %v801 = vpack.c.b16 %v786, %v785
        %v802 = vpack.c.b16 %v788, %v787
        %v803 = vpack.c.b16 %v790, %v789
        %v804 = vpack.c.b16 %v792, %v791
        %v805 = vpack.c.b16 %v794, %v793
        %v806 = vpack.c.b16 %v796, %v795
        %v807 = vpack.c.b16 %v798, %v797
        %v808 = vpack.c.b16 %v800, %v799
        %817 = vmatpush.bf16.msra.mxu0 %v808
        %818 = vmatpush.bf16.msra.mxu0 %v807
        %819 = vmatpush.bf16.msra.mxu0 %v806
        %820 = vmatpush.bf16.msra.mxu0 %v805
        %821 = vmatpush.bf16.msra.mxu0 %v804
        %822 = vmatpush.bf16.msra.mxu0 %v803
        %823 = vmatpush.bf16.msra.mxu0 %v802
        %824 = vmatpush.bf16.msra.mxu0 %v801
        %825 = vmatmul.bf16.gmra.mxu0 %v767
        %v826 = vpop.f32.mrf.mxu0
        %v827 = vadd.f32 0.0, %v826
        %v828 = vpop.f32.mrf.mxu0
        %v829 = vadd.f32 0.0, %v828
        %830 = vdwg.mxu0
        %v831 = vadd.f32 %v745, %v827
        %v832 = vadd.f32 %v746, %v829
        %833 = vst [vmem:[#allocation2] sm:$0xff] %v831
        %834 = vst [vmem:[#allocation2 + $0x8] sm:$0xff] %v832
        %v835 = vld [vmem:[#allocation3] sm:$0xff]
        %v836 = vld [vmem:[#allocation3 + $0x8] sm:$0xff]
        %v837 = vld [vmem:[%s617] sm:$0xf]
        %v838 = vld [vmem:[%s617 + $0x4] sm:$0xf]
        %v839 = vld [vmem:[%s617 + $0x8] sm:$0xf]
        %v840 = vld [vmem:[%s617 + $0xc] sm:$0xf]
        %v841 = vld [vmem:[%s617 + $0x10] sm:$0xf]
        %v842 = vld [vmem:[%s617 + $0x14] sm:$0xf]
        %v843 = vld [vmem:[%s617 + $0x18] sm:$0xf]
        %v844 = vld [vmem:[%s617 + $0x1c] sm:$0xf]
        %v845 = vld [vmem:[%s617 + $0x20] sm:$0xf]
        %v846 = vld [vmem:[%s617 + $0x24] sm:$0xf]
        %v847 = vld [vmem:[%s617 + $0x28] sm:$0xf]
        %v848 = vld [vmem:[%s617 + $0x2c] sm:$0xf]
        %v849 = vld [vmem:[%s617 + $0x30] sm:$0xf]
        %v850 = vld [vmem:[%s617 + $0x34] sm:$0xf]
        %v851 = vld [vmem:[%s617 + $0x38] sm:$0xf]
        %v852 = vld [vmem:[%s617 + $0x3c] sm:$0xf]
        %v855 = vunpack.c.l.b16 %v741
        %v856 = vunpack.c.l.b16 %v742
        %v857 = vpack.c.b16 %v856, %v855
        %v875 = vunpack.c.l.b16 %v837
        %v876 = vunpack.c.l.b16 %v838
        %v877 = vunpack.c.l.b16 %v839
        %v878 = vunpack.c.l.b16 %v840
        %v879 = vunpack.c.l.b16 %v841
        %v880 = vunpack.c.l.b16 %v842
        %v881 = vunpack.c.l.b16 %v843
        %v882 = vunpack.c.l.b16 %v844
        %v883 = vunpack.c.l.b16 %v845
        %v884 = vunpack.c.l.b16 %v846
        %v885 = vunpack.c.l.b16 %v847
        %v886 = vunpack.c.l.b16 %v848
        %v887 = vunpack.c.l.b16 %v849
        %v888 = vunpack.c.l.b16 %v850
        %v889 = vunpack.c.l.b16 %v851
        %v890 = vunpack.c.l.b16 %v852
        %v891 = vpack.c.b16 %v876, %v875
        %v892 = vpack.c.b16 %v878, %v877
        %v893 = vpack.c.b16 %v880, %v879
        %v894 = vpack.c.b16 %v882, %v881
        %v895 = vpack.c.b16 %v884, %v883
        %v896 = vpack.c.b16 %v886, %v885
        %v897 = vpack.c.b16 %v888, %v887
        %v898 = vpack.c.b16 %v890, %v889
        %907 = vmatpush.bf16.msra.mxu0 %v898
        %908 = vmatpush.bf16.msra.mxu0 %v897
        %909 = vmatpush.bf16.msra.mxu0 %v896
        %910 = vmatpush.bf16.msra.mxu0 %v895
        %911 = vmatpush.bf16.msra.mxu0 %v894
        %912 = vmatpush.bf16.msra.mxu0 %v893
        %913 = vmatpush.bf16.msra.mxu0 %v892
        %914 = vmatpush.bf16.msra.mxu0 %v891
        %915 = vmatmul.bf16.gmra.mxu0 %v857
        %v916 = vpop.f32.mrf.mxu0
        %v917 = vadd.f32 0.0, %v916
        %v918 = vpop.f32.mrf.mxu0
        %v919 = vadd.f32 0.0, %v918
        %920 = vdwg.mxu0
        %v921 = vadd.f32 %v835, %v917
        %v922 = vadd.f32 %v836, %v919
        %923 = vst [vmem:[#allocation3] sm:$0xff] %v921
        %924 = vst [vmem:[#allocation3 + $0x8] sm:$0xff] %v922
        %v925 = vld [vmem:[#allocation4] sm:$0xff]
        %v926 = vld [vmem:[#allocation4 + $0x8] sm:$0xff]
        %v927 = vld [vmem:[%s627] sm:$0xf]
        %v928 = vld [vmem:[%s627 + $0x4] sm:$0xf]
        %v929 = vld [vmem:[%s627 + $0x8] sm:$0xf]
        %v930 = vld [vmem:[%s627 + $0xc] sm:$0xf]
        %v931 = vld [vmem:[%s627 + $0x10] sm:$0xf]
        %v932 = vld [vmem:[%s627 + $0x14] sm:$0xf]
        %v933 = vld [vmem:[%s627 + $0x18] sm:$0xf]
        %v934 = vld [vmem:[%s627 + $0x1c] sm:$0xf]
        %v935 = vld [vmem:[%s627 + $0x20] sm:$0xf]
        %v936 = vld [vmem:[%s627 + $0x24] sm:$0xf]
        %v937 = vld [vmem:[%s627 + $0x28] sm:$0xf]
        %v938 = vld [vmem:[%s627 + $0x2c] sm:$0xf]
        %v939 = vld [vmem:[%s627 + $0x30] sm:$0xf]
        %v940 = vld [vmem:[%s627 + $0x34] sm:$0xf]
        %v941 = vld [vmem:[%s627 + $0x38] sm:$0xf]
        %v942 = vld [vmem:[%s627 + $0x3c] sm:$0xf]
        %v945 = vunpack.c.l.b16 %v743
        %v946 = vunpack.c.l.b16 %v744
        %v947 = vpack.c.b16 %v946, %v945
        %v965 = vunpack.c.l.b16 %v927
        %v966 = vunpack.c.l.b16 %v928
        %v967 = vunpack.c.l.b16 %v929
        %v968 = vunpack.c.l.b16 %v930
        %v969 = vunpack.c.l.b16 %v931
        %v970 = vunpack.c.l.b16 %v932
        %v971 = vunpack.c.l.b16 %v933
        %v972 = vunpack.c.l.b16 %v934
        %v973 = vunpack.c.l.b16 %v935
        %v974 = vunpack.c.l.b16 %v936
        %v975 = vunpack.c.l.b16 %v937
        %v976 = vunpack.c.l.b16 %v938
        %v977 = vunpack.c.l.b16 %v939
        %v978 = vunpack.c.l.b16 %v940
        %v979 = vunpack.c.l.b16 %v941
        %v980 = vunpack.c.l.b16 %v942
        %v981 = vpack.c.b16 %v966, %v965
        %v982 = vpack.c.b16 %v968, %v967
        %v983 = vpack.c.b16 %v970, %v969
        %v984 = vpack.c.b16 %v972, %v971
        %v985 = vpack.c.b16 %v974, %v973
        %v986 = vpack.c.b16 %v976, %v975
        %v987 = vpack.c.b16 %v978, %v977
        %v988 = vpack.c.b16 %v980, %v979
        %997 = vmatpush.bf16.msra.mxu0 %v988
        %998 = vmatpush.bf16.msra.mxu0 %v987
        %999 = vmatpush.bf16.msra.mxu0 %v986
        %1000 = vmatpush.bf16.msra.mxu0 %v985
        %1001 = vmatpush.bf16.msra.mxu0 %v984
        %1002 = vmatpush.bf16.msra.mxu0 %v983
        %1003 = vmatpush.bf16.msra.mxu0 %v982
        %1004 = vmatpush.bf16.msra.mxu0 %v981
        %1005 = vmatmul.bf16.gmra.mxu0 %v947
        %v1006 = vpop.f32.mrf.mxu0
        %v1007 = vadd.f32 0.0, %v1006
        %v1008 = vpop.f32.mrf.mxu0
        %v1009 = vadd.f32 0.0, %v1008
        %1010 = vdwg.mxu0
        %v1011 = vadd.f32 %v925, %v1007
        %v1012 = vadd.f32 %v926, %v1009
        %1013 = vst [vmem:[#allocation4] sm:$0xff] %v1011
        %1014 = vst [vmem:[#allocation4 + $0x8] sm:$0xff] %v1012
        %p1015 = scmp.eq.s32.totalorder %s48, 1
        // Predicated region
        $region85: #{tpu_custom_call.1} parent=55 // pred_check
          %p1016 = pneg %p1015
        $region86: #{tpu_custom_call.1} parent=55 // pred_check_branch
          %1018 = sbr.rel (%p1016) target = $region88
        $region87: #{tpu_custom_call.1} parent=55 // pred_region
          %v1019 = vld [vmem:[#allocation2] sm:$0xff]
          %v1020 = vld [vmem:[#allocation2 + $0x8] sm:$0xff]
          %v1021 = vld [vmem:[%s719] sm:$0x1]
          %v1023 = vperm.slane %v1021, 0
          %v1025 = vadd.f32 %v1019, %v1023
          %v1026 = vadd.f32 %v1020, %v1023
          %v1027 = vmul.f32 %v1025, 0.125
          %v1028 = vmul.f32 %v1026, 0.125
          %v1029 = vpack.c.bf16 %v1027, %v1027
          %v1030 = vpack.c.bf16 %v1028, %v1028
          %1031 = vst [vmem:[%s696] sm:$0xf] %v1029
          %1032 = vst [vmem:[%s696 + $0x4] sm:$0xf] %v1030
          %v1033 = vld [vmem:[#allocation3] sm:$0xff]
          %v1034 = vld [vmem:[#allocation3 + $0x8] sm:$0xff]
          %v1035 = vld [vmem:[%s722] sm:$0x1]
          %v1037 = vperm.slane %v1035, 0
          %v1039 = vadd.f32 %v1033, %v1037
          %v1040 = vadd.f32 %v1034, %v1037
          %v1041 = vpack.c.bf16 %v1039, %v1039
          %v1042 = vpack.c.bf16 %v1040, %v1040
          %1043 = vst [vmem:[%s703] sm:$0xf] %v1041
          %1044 = vst [vmem:[%s703 + $0x4] sm:$0xf] %v1042
          %v1045 = vld [vmem:[#allocation4] sm:$0xff]
          %v1046 = vld [vmem:[#allocation4 + $0x8] sm:$0xff]
          %v1047 = vld [vmem:[%s725] sm:$0x1]
          %v1049 = vperm.slane %v1047, 0
          %v1051 = vadd.f32 %v1045, %v1049
          %v1052 = vadd.f32 %v1046, %v1049
          %v1053 = vpack.c.bf16 %v1051, %v1051
          %v1054 = vpack.c.bf16 %v1052, %v1052
          %1055 = vst [vmem:[%s710] sm:$0xf] %v1053
          %1056 = vst [vmem:[%s710 + $0x4] sm:$0xf] %v1054
        $region88: #{tpu_custom_call.1} parent=55 // pred_fallthru
          _
        %s1057 = sand.u32 %s316, 1
        %s1058 = scalar_lea.sflag [#allocation7], %s1057
        %s1059 = sand.u32 %s316, 1
        %s1060 = smul.addr %s1059, 8
        %s1061 = scalar_lea.vmem [#allocation16], %s1060
        %s1062 = sand.u32 %s41, 1
        %s1063 = scalar_lea.sflag [#allocation18], %s1062
        %s1064 = sand.u32 %s344, 1
        %s1065 = smul.addr %s1064, 8
        %s1066 = scalar_lea.vmem [#allocation17], %s1065
        %s1067 = sand.u32 %s41, 1
        %s1068 = scalar_lea.sflag [#allocation18], %s1067
        %s1069 = sand.u32 %s372, 1
        %s1070 = smul.addr %s1069, 8
        %s1071 = scalar_lea.vmem [#allocation19], %s1070
        // Predicated region
        $region89: #{tpu_custom_call.1} parent=55 // pred_check
          %p1072 = pneg %p326
        $region90: #{tpu_custom_call.1} parent=55 // pred_check_branch
          %1074 = sbr.rel (%p1072) target = $region92
        $region91: #{tpu_custom_call.1} parent=55 // pred_region
          %s1075 = smul.u32 2, %s46
          %1077 = vsyncadd %s1058, 0
          %s1078 = smul.addr %s1075, 2
          %s1079 = sadd.s32 %s47, %s1078
          %s1080 = smul.addr %s1079, 4
          %s1081 = scalar_lea.hbm %s9, %s1080
          %s1082 = sshll.u32 %s1061, 4
          %s1083 = int_to_ptr.vmem [resolvable:$true] %s1082
          %s1084 = sshll.u32 %s1081, 4
          %s1085 = int_to_ptr.hbm [resolvable:$true] %s1084
          %1090 = dma.vmem_to_hbm [thread:$0]  %s1083, 128, %s1085, %s1058, 64, 128, 4
        $region92: #{tpu_custom_call.1} parent=55 // pred_fallthru
          _
        // Predicated region
        $region93: #{tpu_custom_call.1} parent=55 // pred_check
          %p1091 = pneg %p354
        $region94: #{tpu_custom_call.1} parent=55 // pred_check_branch
          %1093 = sbr.rel (%p1091) target = $region96
        $region95: #{tpu_custom_call.1} parent=55 // pred_region
          %s1094 = smul.u32 2, %s46
          %1096 = vsyncadd %s1063, 0
          %s1097 = smul.addr %s1094, 2
          %s1098 = sadd.s32 %s47, %s1097
          %s1099 = smul.addr %s1098, 4
          %s1100 = scalar_lea.hbm %s10, %s1099
          %s1101 = sshll.u32 %s1066, 4
          %s1102 = int_to_ptr.vmem [resolvable:$true] %s1101
          %s1103 = sshll.u32 %s1100, 4
          %s1104 = int_to_ptr.hbm [resolvable:$true] %s1103
          %1109 = dma.vmem_to_hbm [thread:$0]  %s1102, 128, %s1104, %s1063, 64, 128, 4
        $region96: #{tpu_custom_call.1} parent=55 // pred_fallthru
          _
        // Predicated region
        $region97: #{tpu_custom_call.1} parent=55 // pred_check
          %p1110 = pneg %p382
        $region98: #{tpu_custom_call.1} parent=55 // pred_check_branch
          %1112 = sbr.rel (%p1110) target = $region100
        $region99: #{tpu_custom_call.1} parent=55 // pred_region
          %s1113 = smul.u32 2, %s46
          %1115 = vsyncadd %s1068, 0
          %s1116 = smul.addr %s1113, 2
          %s1117 = sadd.s32 %s47, %s1116
          %s1118 = smul.addr %s1117, 4
          %s1119 = scalar_lea.hbm %s11, %s1118
          %s1120 = sshll.u32 %s1071, 4
          %s1121 = int_to_ptr.vmem [resolvable:$true] %s1120
          %s1122 = sshll.u32 %s1119, 4
          %s1123 = int_to_ptr.hbm [resolvable:$true] %s1122
          %1128 = dma.vmem_to_hbm [thread:$0]  %s1121, 128, %s1123, %s1068, 64, 128, 4
        $region100: #{tpu_custom_call.1} parent=55 // pred_fallthru
          _
      $region56: #{tpu_custom_call.1} parent=5 // pred_fallthru
        _
      %p1129 = scmp.le.s32.totalorder 2, %s36
      // Predicated region
      $region101: #{tpu_custom_call.1} parent=5 // pred_check
        %p1130 = pneg %p1129
      $region102: #{tpu_custom_call.1} parent=5 // pred_check_branch
        %1132 = sbr.rel (%p1130) target = $region104
      $region103: #{tpu_custom_call.1} parent=5 // pred_region
        %s1133 = ssub.s32 %s36, 2
        // Predicated region
        $region105: #{tpu_custom_call.1} parent=103 // pred_check
          %p1134 = pneg %p332
        $region106: #{tpu_custom_call.1} parent=103 // pred_check_branch
          %1136 = sbr.rel (%p1134) target = $region108
        $region107: #{tpu_custom_call.1} parent=103 // pred_region
          %s1137 = sand.u32 %s317, 1
          %s1138 = scalar_lea.sflag [#allocation7], %s1137
          %s1139 = sand.u32 %s317, 1
          %s1140 = smul.addr %s1139, 8
          %s1141 = scalar_lea.vmem [#allocation16], %s1140
          %1143 = dma.done %s1138, 128
        $region108: #{tpu_custom_call.1} parent=103 // pred_fallthru
          _
        // Predicated region
        $region109: #{tpu_custom_call.1} parent=103 // pred_check
          %p1144 = pneg %p360
        $region110: #{tpu_custom_call.1} parent=103 // pred_check_branch
          %1146 = sbr.rel (%p1144) target = $region112
        $region111: #{tpu_custom_call.1} parent=103 // pred_region
          %s1147 = sand.u32 %s42, 1
          %s1148 = scalar_lea.sflag [#allocation18], %s1147
          %s1149 = sand.u32 %s345, 1
          %s1150 = smul.addr %s1149, 8
          %s1151 = scalar_lea.vmem [#allocation17], %s1150
          %1153 = dma.done %s1148, 128
        $region112: #{tpu_custom_call.1} parent=103 // pred_fallthru
          _
        // Predicated region
        $region113: #{tpu_custom_call.1} parent=103 // pred_check
          %p1154 = pneg %p388
        $region114: #{tpu_custom_call.1} parent=103 // pred_check_branch
          %1156 = sbr.rel (%p1154) target = $region116
        $region115: #{tpu_custom_call.1} parent=103 // pred_region
          %s1157 = sand.u32 %s42, 1
          %s1158 = scalar_lea.sflag [#allocation18], %s1157
          %s1159 = sand.u32 %s373, 1
          %s1160 = smul.addr %s1159, 8
          %s1161 = scalar_lea.vmem [#allocation19], %s1160
          %1163 = dma.done %s1158, 128
        $region116: #{tpu_custom_call.1} parent=103 // pred_fallthru
          _
      $region104: #{tpu_custom_call.1} parent=5 // pred_fallthru
        _
    $region6: #{tpu_custom_call.1} parent=1 // loop_footer
      %s40 = sadd.s32 1, %s36
    $region7: #{tpu_custom_call.1} parent=1 // loop_footer_branch
      %35 = sbr.rel target = $region3
    $region8: #{tpu_custom_call.1} parent=1 // loop_exit
      _
    %1164 = vsyncpa [#allocation6], 1
    %s1165 = scalar_lea.sflag [#allocation6], 1
    %1166 = vsyncpa %s1165, 1
    %1167 = vsyncpa [#allocation9], 1
    %s1168 = scalar_lea.sflag [#allocation9], 1
    %1169 = vsyncpa %s1168, 1
    %1170 = vsyncpa [#allocation12], 1
    %s1171 = scalar_lea.sflag [#allocation12], 1
    %1172 = vsyncpa %s1171, 1
    %1173 = vsyncpa [#allocation15], 1
    %s1174 = scalar_lea.sflag [#allocation15], 1
    %1175 = vsyncpa %s1174, 1
    %1176 = vsyncpa [#allocation7], 1
    %s1177 = scalar_lea.sflag [#allocation7], 1
    %1178 = vsyncpa %s1177, 1
    %1179 = vsyncpa [#allocation18], 1
    %s1180 = scalar_lea.sflag [#allocation18], 1
    %1181 = vsyncpa %s1180, 1

</llo_original>
